<compile_context>
chip_gen: v6e
topology: v6e:2x2x1
jax: 0.10.0
libtpu: 0.0.40
codegen_flags: <defaults>
</compile_context>

<pallas_src>
import functools
import math

import jax
import jax.numpy as jnp
from jax.experimental import pallas as pl
from jax.experimental.pallas import tpu as pltpu


def _mhsa_kernel(x_ref, mask_ref,
                 wq_ref, bq_ref, wk_ref, bk_ref, wv_ref, bv_ref,
                 wo_ref, bo_ref, o_ref,
                 *, num_heads, d_k):
    """Fused multi-head self-attention for the whole batch.

    x_ref:    (B, S, d_model)
    mask_ref: (B, S)            attention mask over the KEY axis (0/1 floats)
    wq/wk/wv: (d_model, H*d_k)  bq/bk/bv: (1, H*d_k)
    wo:       (H*d_k, d_model)  bo:       (1, d_model)
    o_ref:    (B, S, d_model)
    """
    b, s, d_model = x_ref.shape
    hdk = num_heads * d_k

    x2d = x_ref[...].reshape(b * s, d_model)

    # Q/K/V projections: one big MXU matmul each over the flattened token axis.
    q = jnp.dot(x2d, wq_ref[...], preferred_element_type=jnp.float32) + bq_ref[...]
    k = jnp.dot(x2d, wk_ref[...], preferred_element_type=jnp.float32) + bk_ref[...]
    v = jnp.dot(x2d, wv_ref[...], preferred_element_type=jnp.float32) + bv_ref[...]

    q = q.reshape(b, s, hdk)
    k = k.reshape(b, s, hdk)
    v = v.reshape(b, s, hdk)

    # mask[b, k] multiplies every score row; broadcast over the query axis.
    mask = mask_ref[...][:, None, :]                      # (B, 1, S)
    inv_sqrt_dk = 1.0 / math.sqrt(d_k)

    head_ctx = []
    for h in range(num_heads):                            # static unroll, tiny H
        lo = h * d_k
        qh = q[:, :, lo:lo + d_k]                         # (B, S, d_k)
        kh = k[:, :, lo:lo + d_k]
        vh = v[:, :, lo:lo + d_k]

        scores = jnp.einsum('bqd,bkd->bqk', qh, kh,
                            preferred_element_type=jnp.float32) * inv_sqrt_dk
        scores = jnp.exp(scores) * mask                   # torch: exp then mask (no max-sub)
        attn = scores / (jnp.sum(scores, axis=-1, keepdims=True) + 1e-8)
        # nn.Dropout on attn: identity in inference mode.
        head_ctx.append(jnp.einsum('bqk,bkd->bqd', attn, vh,
                                   preferred_element_type=jnp.float32))

    ctx = jnp.concatenate(head_ctx, axis=-1)              # (B, S, H*d_k)

    out = jnp.dot(ctx.reshape(b * s, hdk), wo_ref[...],
                  preferred_element_type=jnp.float32) + bo_ref[...]
    o_ref[...] = out.reshape(b, s, d_model).astype(o_ref.dtype)


def mhsa_forward(x, mask, params, *, num_heads, d_k):
    """x: (B, S, d_model) float32, mask: (B, S) float32.  Returns (B, S, d_model)."""
    b, s, d_model = x.shape
    kernel = functools.partial(_mhsa_kernel, num_heads=num_heads, d_k=d_k)
    vmem = pltpu.MemorySpace.VMEM
    return pl.pallas_call(
        kernel,
        out_shape=jax.ShapeDtypeStruct((b, s, d_model), jnp.float32),
        in_specs=[pl.BlockSpec(memory_space=vmem)] * 10,   # whole arrays, single invocation
        out_specs=pl.BlockSpec(memory_space=vmem),
    )(x, mask,
      params["wq"], params["bq"], params["wk"], params["bk"],
      params["wv"], params["bv"], params["wo"], params["bo"])


def init_params(key, d_model, d_k, num_heads):
    """Matches nn.Linear default init; weights stored (in, out) for x @ W."""
    hdk = d_k * num_heads
    ks = jax.random.split(key, 8)

    def linear(kw, kb, fan_in, fan_out):
        bound = 1.0 / math.sqrt(fan_in)
        w = jax.random.uniform(kw, (fan_in, fan_out), jnp.float32, -bound, bound)
        b = jax.random.uniform(kb, (1, fan_out), jnp.float32, -bound, bound)
        return w, b

    wq, bq = linear(ks[0], ks[1], d_model, hdk)
    wk, bk = linear(ks[2], ks[3], d_model, hdk)
    wv, bv = linear(ks[4], ks[5], d_model, hdk)
    wo, bo = linear(ks[6], ks[7], hdk, d_model)
    return dict(wq=wq, bq=bq, wk=wk, bk=bk, wv=wv, bv=bv, wo=wo, bo=bo)


def mhsa_reference(x, mask, params, *, num_heads, d_k):
    """Pure-JAX reference mirroring the PyTorch forward exactly."""
    b, s, d_model = x.shape
    hdk = num_heads * d_k
    x2d = x.reshape(b * s, d_model)
    q = (x2d @ params["wq"] + params["bq"]).reshape(b, s, num_heads, d_k).transpose(0, 2, 1, 3)
    k = (x2d @ params["wk"] + params["bk"]).reshape(b, s, num_heads, d_k).transpose(0, 2, 1, 3)
    v = (x2d @ params["wv"] + params["bv"]).reshape(b, s, num_heads, d_k).transpose(0, 2, 1, 3)
    scores = jnp.exp(jnp.einsum('bhqd,bhkd->bhqk', q, k) / math.sqrt(d_k))
    scores = scores * mask[:, None, None, :]
    attn = scores / (jnp.sum(scores, axis=-1, keepdims=True) + 1e-8)
    ctx = jnp.einsum('bhqk,bhkd->bhqd', attn, v).transpose(0, 2, 1, 3).reshape(b, s, hdk)
    out = ctx.reshape(b * s, hdk) @ params["wo"] + params["bo"]
    return out.reshape(b, s, d_model)


if __name__ == "__main__":
    key = jax.random.PRNGKey(0)
    k_x, k_m, k_p = jax.random.split(key, 3)

    # d_model=32, attention_dim (d_k)=16, num_attention_heads=4, dropout=0.1 (inference: identity)
    B, S, D_MODEL, D_K, HEADS = 2, 8, 32, 16, 4

    x = jax.random.normal(k_x, (B, S, D_MODEL), jnp.float32)
    mask = (jax.random.uniform(k_m, (B, S)) < 0.8).astype(jnp.float32)  # (B, S) key mask
    params = init_params(k_p, D_MODEL, D_K, HEADS)

    fwd = jax.jit(functools.partial(mhsa_forward, num_heads=HEADS, d_k=D_K))
    out = jax.block_until_ready(fwd(x, mask, params))

    assert out.shape == (B, S, D_MODEL), out.shape
    assert bool(jnp.all(jnp.isfinite(out)))

    ref = mhsa_reference(x, mask, params, num_heads=HEADS, d_k=D_K)
    assert bool(jnp.allclose(out, ref, rtol=1e-2, atol=1e-2)), \
        float(jnp.max(jnp.abs(out - ref)))

    print("KERNEL_OK")
</pallas_src>

<mosaic_0001>
module attributes {stable_mosaic.version = 11 : i64} {
  func.func @_mhsa_kernel(%arg0: memref<2x8x32xf32, #tpu.memory_space<vmem>>, %arg1: memref<2x8xf32, #tpu.memory_space<vmem>>, %arg2: memref<32x64xf32, #tpu.memory_space<vmem>>, %arg3: memref<1x64xf32, #tpu.memory_space<vmem>>, %arg4: memref<32x64xf32, #tpu.memory_space<vmem>>, %arg5: memref<1x64xf32, #tpu.memory_space<vmem>>, %arg6: memref<32x64xf32, #tpu.memory_space<vmem>>, %arg7: memref<1x64xf32, #tpu.memory_space<vmem>>, %arg8: memref<64x32xf32, #tpu.memory_space<vmem>>, %arg9: memref<1x32xf32, #tpu.memory_space<vmem>>, %arg10: memref<2x8x32xf32, #tpu.memory_space<vmem>>) attributes {dimension_semantics = [], scalar_prefetch = 0 : i64, scratch_operands = 0 : i64, tpu.core_type = #tpu.core_type<tc>} {
    %c0 = arith.constant 0 : index
    %c0_0 = arith.constant 0 : index
    %c0_1 = arith.constant 0 : index
    %0 = vector.load %arg0[%c0, %c0_0, %c0_1] : memref<2x8x32xf32, #tpu.memory_space<vmem>>, vector<2x8x32xf32>
    %1 = vector.shape_cast %0 : vector<2x8x32xf32> to vector<16x32xf32>
    %c0_2 = arith.constant 0 : index
    %c0_3 = arith.constant 0 : index
    %2 = vector.load %arg2[%c0_2, %c0_3] : memref<32x64xf32, #tpu.memory_space<vmem>>, vector<32x64xf32>
    %cst = arith.constant dense<0.000000e+00> : vector<16x64xf32>
    %3 = tpu.matmul %1, %2, %cst {dimension_numbers = #tpu.dot_dimension_numbers<[1], [0], [0], [1], [0, 0, 1, 1], [], []>} : vector<16x32xf32>, vector<32x64xf32>, vector<16x64xf32> -> vector<16x64xf32>
    %c0_4 = arith.constant 0 : index
    %c0_5 = arith.constant 0 : index
    %4 = vector.load %arg3[%c0_4, %c0_5] : memref<1x64xf32, #tpu.memory_space<vmem>>, vector<1x64xf32>
    %5 = vector.broadcast %4 : vector<1x64xf32> to vector<16x64xf32>
    %6 = arith.addf %3, %5 : vector<16x64xf32>
    %c0_6 = arith.constant 0 : index
    %c0_7 = arith.constant 0 : index
    %7 = vector.load %arg4[%c0_6, %c0_7] : memref<32x64xf32, #tpu.memory_space<vmem>>, vector<32x64xf32>
    %cst_8 = arith.constant dense<0.000000e+00> : vector<16x64xf32>
    %8 = tpu.matmul %1, %7, %cst_8 {dimension_numbers = #tpu.dot_dimension_numbers<[1], [0], [0], [1], [0, 0, 1, 1], [], []>} : vector<16x32xf32>, vector<32x64xf32>, vector<16x64xf32> -> vector<16x64xf32>
    %c0_9 = arith.constant 0 : index
    %c0_10 = arith.constant 0 : index
    %9 = vector.load %arg5[%c0_9, %c0_10] : memref<1x64xf32, #tpu.memory_space<vmem>>, vector<1x64xf32>
    %10 = vector.broadcast %9 : vector<1x64xf32> to vector<16x64xf32>
    %11 = arith.addf %8, %10 : vector<16x64xf32>
    %c0_11 = arith.constant 0 : index
    %c0_12 = arith.constant 0 : index
    %12 = vector.load %arg6[%c0_11, %c0_12] : memref<32x64xf32, #tpu.memory_space<vmem>>, vector<32x64xf32>
    %cst_13 = arith.constant dense<0.000000e+00> : vector<16x64xf32>
    %13 = tpu.matmul %1, %12, %cst_13 {dimension_numbers = #tpu.dot_dimension_numbers<[1], [0], [0], [1], [0, 0, 1, 1], [], []>} : vector<16x32xf32>, vector<32x64xf32>, vector<16x64xf32> -> vector<16x64xf32>
    %c0_14 = arith.constant 0 : index
    %c0_15 = arith.constant 0 : index
    %14 = vector.load %arg7[%c0_14, %c0_15] : memref<1x64xf32, #tpu.memory_space<vmem>>, vector<1x64xf32>
    %15 = vector.broadcast %14 : vector<1x64xf32> to vector<16x64xf32>
    %16 = arith.addf %13, %15 : vector<16x64xf32>
    %17 = vector.shape_cast %6 : vector<16x64xf32> to vector<2x8x64xf32>
    %18 = vector.shape_cast %11 : vector<16x64xf32> to vector<2x8x64xf32>
    %19 = vector.shape_cast %16 : vector<16x64xf32> to vector<2x8x64xf32>
    %c0_16 = arith.constant 0 : index
    %c0_17 = arith.constant 0 : index
    %20 = vector.load %arg1[%c0_16, %c0_17] : memref<2x8xf32, #tpu.memory_space<vmem>>, vector<2x8xf32>
    %21 = vector.shape_cast %20 : vector<2x8xf32> to vector<2x1x8xf32>
    %22 = vector.extract_strided_slice %17 {offsets = [0, 0, 0], sizes = [2, 8, 16], strides = [1, 1, 1]} : vector<2x8x64xf32> to vector<2x8x16xf32>
    %23 = vector.extract_strided_slice %18 {offsets = [0, 0, 0], sizes = [2, 8, 16], strides = [1, 1, 1]} : vector<2x8x64xf32> to vector<2x8x16xf32>
    %24 = vector.extract_strided_slice %19 {offsets = [0, 0, 0], sizes = [2, 8, 16], strides = [1, 1, 1]} : vector<2x8x64xf32> to vector<2x8x16xf32>
    "tpu.trace_start"() <{level = 10 : i32, message = "bqd,bkd->bqk"}> : () -> ()
    %cst_18 = arith.constant dense<0.000000e+00> : vector<2x8x8xf32>
    %25 = tpu.matmul %22, %23, %cst_18 {dimension_numbers = #tpu.dot_dimension_numbers<[2], [2], [1], [1], [0, 0, 0, 1, 1, 1], [0], [0]>} : vector<2x8x16xf32>, vector<2x8x16xf32>, vector<2x8x8xf32> -> vector<2x8x8xf32>
    "tpu.trace_stop"() : () -> ()
    %cst_19 = arith.constant 2.500000e-01 : f32
    %26 = vector.broadcast %cst_19 : f32 to vector<2x8x8xf32>
    %27 = arith.mulf %25, %26 : vector<2x8x8xf32>
    %28 = math.exp %27 : vector<2x8x8xf32>
    %29 = vector.broadcast %21 : vector<2x1x8xf32> to vector<2x8x8xf32>
    %30 = arith.mulf %28, %29 : vector<2x8x8xf32>
    %cst_20 = arith.constant dense<0.000000e+00> : vector<2x8xf32>
    %31 = vector.multi_reduction <add>, %30, %cst_20 [2] : vector<2x8x8xf32> to vector<2x8xf32>
    %32 = vector.shape_cast %31 : vector<2x8xf32> to vector<2x8x1xf32>
    %cst_21 = arith.constant 9.99999993E-9 : f32
    %33 = vector.broadcast %cst_21 : f32 to vector<2x8x1xf32>
    %34 = arith.addf %32, %33 : vector<2x8x1xf32>
    %35 = vector.broadcast %34 : vector<2x8x1xf32> to vector<2x8x8xf32>
    %36 = arith.divf %30, %35 : vector<2x8x8xf32>
    "tpu.trace_start"() <{level = 10 : i32, message = "bqk,bkd->bqd"}> : () -> ()
    %cst_22 = arith.constant dense<0.000000e+00> : vector<2x8x16xf32>
    %37 = tpu.matmul %36, %24, %cst_22 {dimension_numbers = #tpu.dot_dimension_numbers<[2], [1], [1], [2], [0, 0, 0, 1, 1, 2], [0], [0]>} : vector<2x8x8xf32>, vector<2x8x16xf32>, vector<2x8x16xf32> -> vector<2x8x16xf32>
    "tpu.trace_stop"() : () -> ()
    %38 = vector.extract_strided_slice %17 {offsets = [0, 0, 16], sizes = [2, 8, 16], strides = [1, 1, 1]} : vector<2x8x64xf32> to vector<2x8x16xf32>
    %39 = vector.extract_strided_slice %18 {offsets = [0, 0, 16], sizes = [2, 8, 16], strides = [1, 1, 1]} : vector<2x8x64xf32> to vector<2x8x16xf32>
    %40 = vector.extract_strided_slice %19 {offsets = [0, 0, 16], sizes = [2, 8, 16], strides = [1, 1, 1]} : vector<2x8x64xf32> to vector<2x8x16xf32>
    "tpu.trace_start"() <{level = 10 : i32, message = "bqd,bkd->bqk"}> : () -> ()
    %cst_23 = arith.constant dense<0.000000e+00> : vector<2x8x8xf32>
    %41 = tpu.matmul %38, %39, %cst_23 {dimension_numbers = #tpu.dot_dimension_numbers<[2], [2], [1], [1], [0, 0, 0, 1, 1, 1], [0], [0]>} : vector<2x8x16xf32>, vector<2x8x16xf32>, vector<2x8x8xf32> -> vector<2x8x8xf32>
    "tpu.trace_stop"() : () -> ()
    %cst_24 = arith.constant 2.500000e-01 : f32
    %42 = vector.broadcast %cst_24 : f32 to vector<2x8x8xf32>
    %43 = arith.mulf %41, %42 : vector<2x8x8xf32>
    %44 = math.exp %43 : vector<2x8x8xf32>
    %45 = vector.broadcast %21 : vector<2x1x8xf32> to vector<2x8x8xf32>
    %46 = arith.mulf %44, %45 : vector<2x8x8xf32>
    %cst_25 = arith.constant dense<0.000000e+00> : vector<2x8xf32>
    %47 = vector.multi_reduction <add>, %46, %cst_25 [2] : vector<2x8x8xf32> to vector<2x8xf32>
    %48 = vector.shape_cast %47 : vector<2x8xf32> to vector<2x8x1xf32>
    %cst_26 = arith.constant 9.99999993E-9 : f32
    %49 = vector.broadcast %cst_26 : f32 to vector<2x8x1xf32>
    %50 = arith.addf %48, %49 : vector<2x8x1xf32>
    %51 = vector.broadcast %50 : vector<2x8x1xf32> to vector<2x8x8xf32>
    %52 = arith.divf %46, %51 : vector<2x8x8xf32>
    "tpu.trace_start"() <{level = 10 : i32, message = "bqk,bkd->bqd"}> : () -> ()
    %cst_27 = arith.constant dense<0.000000e+00> : vector<2x8x16xf32>
    %53 = tpu.matmul %52, %40, %cst_27 {dimension_numbers = #tpu.dot_dimension_numbers<[2], [1], [1], [2], [0, 0, 0, 1, 1, 2], [0], [0]>} : vector<2x8x8xf32>, vector<2x8x16xf32>, vector<2x8x16xf32> -> vector<2x8x16xf32>
    "tpu.trace_stop"() : () -> ()
    %54 = vector.extract_strided_slice %17 {offsets = [0, 0, 32], sizes = [2, 8, 16], strides = [1, 1, 1]} : vector<2x8x64xf32> to vector<2x8x16xf32>
    %55 = vector.extract_strided_slice %18 {offsets = [0, 0, 32], sizes = [2, 8, 16], strides = [1, 1, 1]} : vector<2x8x64xf32> to vector<2x8x16xf32>
    %56 = vector.extract_strided_slice %19 {offsets = [0, 0, 32], sizes = [2, 8, 16], strides = [1, 1, 1]} : vector<2x8x64xf32> to vector<2x8x16xf32>
    "tpu.trace_start"() <{level = 10 : i32, message = "bqd,bkd->bqk"}> : () -> ()
    %cst_28 = arith.constant dense<0.000000e+00> : vector<2x8x8xf32>
    %57 = tpu.matmul %54, %55, %cst_28 {dimension_numbers = #tpu.dot_dimension_numbers<[2], [2], [1], [1], [0, 0, 0, 1, 1, 1], [0], [0]>} : vector<2x8x16xf32>, vector<2x8x16xf32>, vector<2x8x8xf32> -> vector<2x8x8xf32>
    "tpu.trace_stop"() : () -> ()
    %cst_29 = arith.constant 2.500000e-01 : f32
    %58 = vector.broadcast %cst_29 : f32 to vector<2x8x8xf32>
    %59 = arith.mulf %57, %58 : vector<2x8x8xf32>
    %60 = math.exp %59 : vector<2x8x8xf32>
    %61 = vector.broadcast %21 : vector<2x1x8xf32> to vector<2x8x8xf32>
    %62 = arith.mulf %60, %61 : vector<2x8x8xf32>
    %cst_30 = arith.constant dense<0.000000e+00> : vector<2x8xf32>
    %63 = vector.multi_reduction <add>, %62, %cst_30 [2] : vector<2x8x8xf32> to vector<2x8xf32>
    %64 = vector.shape_cast %63 : vector<2x8xf32> to vector<2x8x1xf32>
    %cst_31 = arith.constant 9.99999993E-9 : f32
    %65 = vector.broadcast %cst_31 : f32 to vector<2x8x1xf32>
    %66 = arith.addf %64, %65 : vector<2x8x1xf32>
    %67 = vector.broadcast %66 : vector<2x8x1xf32> to vector<2x8x8xf32>
    %68 = arith.divf %62, %67 : vector<2x8x8xf32>
    "tpu.trace_start"() <{level = 10 : i32, message = "bqk,bkd->bqd"}> : () -> ()
    %cst_32 = arith.constant dense<0.000000e+00> : vector<2x8x16xf32>
    %69 = tpu.matmul %68, %56, %cst_32 {dimension_numbers = #tpu.dot_dimension_numbers<[2], [1], [1], [2], [0, 0, 0, 1, 1, 2], [0], [0]>} : vector<2x8x8xf32>, vector<2x8x16xf32>, vector<2x8x16xf32> -> vector<2x8x16xf32>
    "tpu.trace_stop"() : () -> ()
    %70 = vector.extract_strided_slice %17 {offsets = [0, 0, 48], sizes = [2, 8, 16], strides = [1, 1, 1]} : vector<2x8x64xf32> to vector<2x8x16xf32>
    %71 = vector.extract_strided_slice %18 {offsets = [0, 0, 48], sizes = [2, 8, 16], strides = [1, 1, 1]} : vector<2x8x64xf32> to vector<2x8x16xf32>
    %72 = vector.extract_strided_slice %19 {offsets = [0, 0, 48], sizes = [2, 8, 16], strides = [1, 1, 1]} : vector<2x8x64xf32> to vector<2x8x16xf32>
    "tpu.trace_start"() <{level = 10 : i32, message = "bqd,bkd->bqk"}> : () -> ()
    %cst_33 = arith.constant dense<0.000000e+00> : vector<2x8x8xf32>
    %73 = tpu.matmul %70, %71, %cst_33 {dimension_numbers = #tpu.dot_dimension_numbers<[2], [2], [1], [1], [0, 0, 0, 1, 1, 1], [0], [0]>} : vector<2x8x16xf32>, vector<2x8x16xf32>, vector<2x8x8xf32> -> vector<2x8x8xf32>
    "tpu.trace_stop"() : () -> ()
    %cst_34 = arith.constant 2.500000e-01 : f32
    %74 = vector.broadcast %cst_34 : f32 to vector<2x8x8xf32>
    %75 = arith.mulf %73, %74 : vector<2x8x8xf32>
    %76 = math.exp %75 : vector<2x8x8xf32>
    %77 = vector.broadcast %21 : vector<2x1x8xf32> to vector<2x8x8xf32>
    %78 = arith.mulf %76, %77 : vector<2x8x8xf32>
    %cst_35 = arith.constant dense<0.000000e+00> : vector<2x8xf32>
    %79 = vector.multi_reduction <add>, %78, %cst_35 [2] : vector<2x8x8xf32> to vector<2x8xf32>
    %80 = vector.shape_cast %79 : vector<2x8xf32> to vector<2x8x1xf32>
    %cst_36 = arith.constant 9.99999993E-9 : f32
    %81 = vector.broadcast %cst_36 : f32 to vector<2x8x1xf32>
    %82 = arith.addf %80, %81 : vector<2x8x1xf32>
    %83 = vector.broadcast %82 : vector<2x8x1xf32> to vector<2x8x8xf32>
    %84 = arith.divf %78, %83 : vector<2x8x8xf32>
    "tpu.trace_start"() <{level = 10 : i32, message = "bqk,bkd->bqd"}> : () -> ()
    %cst_37 = arith.constant dense<0.000000e+00> : vector<2x8x16xf32>
    %85 = tpu.matmul %84, %72, %cst_37 {dimension_numbers = #tpu.dot_dimension_numbers<[2], [1], [1], [2], [0, 0, 0, 1, 1, 2], [0], [0]>} : vector<2x8x8xf32>, vector<2x8x16xf32>, vector<2x8x16xf32> -> vector<2x8x16xf32>
    "tpu.trace_stop"() : () -> ()
    %86 = tpu.concatenate %37, %53, %69, %85 in 2 : vector<2x8x16xf32>, vector<2x8x16xf32>, vector<2x8x16xf32>, vector<2x8x16xf32> -> vector<2x8x64xf32>
    %87 = vector.shape_cast %86 : vector<2x8x64xf32> to vector<16x64xf32>
    %c0_38 = arith.constant 0 : index
    %c0_39 = arith.constant 0 : index
    %88 = vector.load %arg8[%c0_38, %c0_39] : memref<64x32xf32, #tpu.memory_space<vmem>>, vector<64x32xf32>
    %cst_40 = arith.constant dense<0.000000e+00> : vector<16x32xf32>
    %89 = tpu.matmul %87, %88, %cst_40 {dimension_numbers = #tpu.dot_dimension_numbers<[1], [0], [0], [1], [0, 0, 1, 1], [], []>} : vector<16x64xf32>, vector<64x32xf32>, vector<16x32xf32> -> vector<16x32xf32>
    %c0_41 = arith.constant 0 : index
    %c0_42 = arith.constant 0 : index
    %90 = vector.load %arg9[%c0_41, %c0_42] : memref<1x32xf32, #tpu.memory_space<vmem>>, vector<1x32xf32>
    %91 = vector.broadcast %90 : vector<1x32xf32> to vector<16x32xf32>
    %92 = arith.addf %89, %91 : vector<16x32xf32>
    %93 = vector.shape_cast %92 : vector<16x32xf32> to vector<2x8x32xf32>
    %c0_43 = arith.constant 0 : index
    %c0_44 = arith.constant 0 : index
    %c0_45 = arith.constant 0 : index
    %94 = vector.load %arg10[%c0_43, %c0_44, %c0_45] : memref<2x8x32xf32, #tpu.memory_space<vmem>>, vector<2x8x32xf32>
    tpu.vector_store %arg10[%c0_43, %c0_44, %c0_45], %93 {strides = array<i32>} : memref<2x8x32xf32, #tpu.memory_space<vmem>>, vector<2x8x32xf32>,
    return
  }
}

</mosaic_0001>

<llo_original>
// kernel: mhsa_forward.1
$region0: #{mhsa_forward.1}
  #allocation0 [shape = 'u32[]', space=smem, size = 0x4, offset = 0x4, fixed_abs, tag = 'smem constant byte address 0x4 - core index']
  #allocation1 [shape = 'u32[144,128]{1,0:T(1,128)}', space=vmem, size = 0x12000, scoped, tag = 'internal scratch']
  %s0 = inlined_call_operand.hbm [shape: f32[2,8,32], index: 0, kind: input, shape index: {}]
  %s1 = inlined_call_operand.hbm [shape: f32[2,8], index: 1, kind: input, shape index: {}]
  %s2 = inlined_call_operand.vmem [shape: f32[32,64], index: 2, kind: input, shape index: {}]
  %s3 = inlined_call_operand.vmem [shape: f32[1,64], index: 3, kind: input, shape index: {}]
  %s4 = inlined_call_operand.vmem [shape: f32[32,64], index: 4, kind: input, shape index: {}]
  %s5 = inlined_call_operand.vmem [shape: f32[1,64], index: 5, kind: input, shape index: {}]
  %s6 = inlined_call_operand.vmem [shape: f32[32,64], index: 6, kind: input, shape index: {}]
  %s7 = inlined_call_operand.vmem [shape: f32[1,64], index: 7, kind: input, shape index: {}]
  %s8 = inlined_call_operand.vmem [shape: f32[64,32], index: 8, kind: input, shape index: {}]
  %s9 = inlined_call_operand.vmem [shape: f32[1,32], index: 9, kind: input, shape index: {}]
  %s10 = inlined_call_operand.hbm [shape: f32[2,8,32], index: 10, kind: output, shape index: {}]
  %s11 = sld [smem:[#allocation0]]
  $region58: #{mhsa_forward.1} parent=0
    _
  %s13 = ssub.s32 1, %s11
  %s14 = scalar_select 0, %s13, %s11
  $region1: #{mhsa_forward.1} parent=0
    #allocation2 [shape = 'u8[8192]{0}', space=vmem, size = 0x2000, scoped, tag = 'input window, operand 0, single buffered']
    #allocation3 [shape = 's32[1]{0}', space=sflag, size = 0x4, scoped, tag = 'scoped memory for mhsa_forward.1']
    #allocation4 [shape = 's32[1]{0}', space=sflag, size = 0x4, scoped, tag = 'scoped memory for mhsa_forward.1']
    #allocation5 [shape = 'u8[1024]{0}', space=vmem, size = 0x400, scoped, tag = 'input window, operand 1, single buffered']
    #allocation6 [shape = 's32[1]{0}', space=sflag, size = 0x4, scoped, tag = 'scoped memory for mhsa_forward.1']
    #allocation7 [shape = 'u8[8192]{0}', space=vmem, size = 0x2000, scoped, tag = 'output window, operand 0, single buffered']
    %15 = vsyncpa [#allocation3], 0
    %16 = vsyncpa [#allocation6], 0
    %17 = vsyncpa [#allocation4], 0
    // Predicated region
    $region2: #{mhsa_forward.1} parent=1 // pred_check
      _
    $region3: #{mhsa_forward.1} parent=1 // pred_check_branch
      %19 = sbr.rel (0) target = $region5
    $region4: #{mhsa_forward.1} parent=1 // pred_region
      %s21 = ssub.s32 256, 256
      %22 = vsyncadd [#allocation3], %s21
      %s23 = sshll.u32 [#allocation2], 4
      %s24 = int_to_ptr.vmem [resolvable:$true] %s23
      %29 = dma.hbm_to_vmem [thread:$0]  %s0, 256, %s24, [#allocation3], 128, 128, 8
    $region5: #{mhsa_forward.1} parent=1 // pred_fallthru
      _
    // Predicated region
    $region6: #{mhsa_forward.1} parent=1 // pred_check
      _
    $region7: #{mhsa_forward.1} parent=1 // pred_check_branch
      %31 = sbr.rel (0) target = $region9
    $region8: #{mhsa_forward.1} parent=1 // pred_region
      %s33 = ssub.s32 32, 32
      %34 = vsyncadd [#allocation6], %s33
      %s36 = sshll.u32 [#allocation5], 4
      %s37 = int_to_ptr.vmem [resolvable:$true] %s36
      %39 = dma.hbm_to_vmem [thread:$0]  %s1, 32, %s37, [#allocation6]
    $region9: #{mhsa_forward.1} parent=1 // pred_fallthru
      _
    // Predicated region
    $region10: #{mhsa_forward.1} parent=1 // pred_check
      _
    $region11: #{mhsa_forward.1} parent=1 // pred_check_branch
      %41 = sbr.rel (0) target = $region13
    $region12: #{mhsa_forward.1} parent=1 // pred_region
      _
    $region13: #{mhsa_forward.1} parent=1 // pred_fallthru
      _
    // Predicated region
    $region14: #{mhsa_forward.1} parent=1 // pred_check
      _
    $region15: #{mhsa_forward.1} parent=1 // pred_check_branch
      %43 = sbr.rel (0) target = $region17
    $region16: #{mhsa_forward.1} parent=1 // pred_region
      _
    $region17: #{mhsa_forward.1} parent=1 // pred_fallthru
      _
    // Predicated region
    $region18: #{mhsa_forward.1} parent=1 // pred_check
      _
    $region19: #{mhsa_forward.1} parent=1 // pred_check_branch
      %45 = sbr.rel (0) target = $region21
    $region20: #{mhsa_forward.1} parent=1 // pred_region
      _
    $region21: #{mhsa_forward.1} parent=1 // pred_fallthru
      _
    // Predicated region
    $region22: #{mhsa_forward.1} parent=1 // pred_check
      _
    $region23: #{mhsa_forward.1} parent=1 // pred_check_branch
      %47 = sbr.rel (0) target = $region25
    $region24: #{mhsa_forward.1} parent=1 // pred_region
      _
    $region25: #{mhsa_forward.1} parent=1 // pred_fallthru
      _
    // Predicated region
    $region26: #{mhsa_forward.1} parent=1 // pred_check
      _
    $region27: #{mhsa_forward.1} parent=1 // pred_check_branch
      %49 = sbr.rel (0) target = $region29
    $region28: #{mhsa_forward.1} parent=1 // pred_region
      _
    $region29: #{mhsa_forward.1} parent=1 // pred_fallthru
      _
    // Predicated region
    $region30: #{mhsa_forward.1} parent=1 // pred_check
      _
    $region31: #{mhsa_forward.1} parent=1 // pred_check_branch
      %51 = sbr.rel (0) target = $region33
    $region32: #{mhsa_forward.1} parent=1 // pred_region
      _
    $region33: #{mhsa_forward.1} parent=1 // pred_fallthru
      _
    // Predicated region
    $region34: #{mhsa_forward.1} parent=1 // pred_check
      _
    $region35: #{mhsa_forward.1} parent=1 // pred_check_branch
      %53 = sbr.rel (0) target = $region37
    $region36: #{mhsa_forward.1} parent=1 // pred_region
      _
    $region37: #{mhsa_forward.1} parent=1 // pred_fallthru
      _
    // Predicated region
    $region38: #{mhsa_forward.1} parent=1 // pred_check
      _
    $region39: #{mhsa_forward.1} parent=1 // pred_check_branch
      %55 = sbr.rel (0) target = $region41
    $region40: #{mhsa_forward.1} parent=1 // pred_region
      _
    $region41: #{mhsa_forward.1} parent=1 // pred_fallthru
      _
    // Predicated region
    $region42: #{mhsa_forward.1} parent=1 // pred_check
      _
    $region43: #{mhsa_forward.1} parent=1 // pred_check_branch
      %57 = sbr.rel (0) target = $region45
    $region44: #{mhsa_forward.1} parent=1 // pred_region
      %58 = dma.done [#allocation3], 256
    $region45: #{mhsa_forward.1} parent=1 // pred_fallthru
      _
    // Predicated region
    $region46: #{mhsa_forward.1} parent=1 // pred_check
      _
    $region47: #{mhsa_forward.1} parent=1 // pred_check_branch
      %60 = sbr.rel (0) target = $region49
    $region48: #{mhsa_forward.1} parent=1 // pred_region
      %61 = dma.done [#allocation6], 32
    $region49: #{mhsa_forward.1} parent=1 // pred_fallthru
      _
    %v62 = vld [vmem:[#allocation2] sm:$0xff]
    %v63 = vld [vmem:[#allocation2 + $0x8] sm:$0xff]
    %v64 = vld [vmem:[%s2] sm:$0xff]
    %v65 = vld [vmem:[%s2 + $0x8] sm:$0xff]
    %v66 = vld [vmem:[%s2 + $0x10] sm:$0xff]
    %v67 = vld [vmem:[%s2 + $0x18] sm:$0xff]
    %v68 = vld [vmem:[%s3] sm:$0x1]
    %v70 = vlaneseq
    %v71 = vshrl.u32 %v70, 7
    %v72 = vsub.s32 0, %v71
    %v73 = vrot.slane %v68, %v72
    %vm75 = vcmask 261120
    %v77 = vsel %vm75, %v62, 0
    %v80 = vsel %vm75, %v63, 0
    %82 = vmatprep.subr.mxu0 0.0
    %83 = vmatpush1.msra.mxu0 0.0
    %84 = vmatprep.subr.mxu0 0.0
    %85 = vmatpush1.msra.mxu0 0.0
    %86 = vmatprep.subr.mxu0 0.0
    %87 = vmatpush1.msra.mxu0 0.0
    %88 = vmatprep.subr.mxu0 0.0
    %89 = vmatpush1.msra.mxu0 0.0
    %90 = vmatprep.subr.mxu0 0.0
    %91 = vmatpush1.msra.mxu0 0.0
    %92 = vmatprep.subr.mxu0 0.0
    %93 = vmatpush1.msra.mxu0 0.0
    %94 = vmatprep.subr.mxu0 0.0
    %95 = vmatpush1.msra.mxu0 0.0
    %96 = vmatprep.subr.mxu0 0.0
    %97 = vmatpush1.msra.mxu0 0.0
    %98 = vmatprep.subr.mxu0 0.0
    %99 = vmatpush1.msra.mxu0 0.0
    %100 = vmatprep.subr.mxu0 0.0
    %101 = vmatpush1.msra.mxu0 0.0
    %102 = vmatprep.subr.mxu0 0.0
    %103 = vmatpush1.msra.mxu0 0.0
    %104 = vmatprep.subr.mxu0 0.0
    %105 = vmatpush1.msra.mxu0 0.0
    %106 = vmatprep.subr.mxu0 0.0
    %107 = vmatpush1.msra.mxu0 %v67
    %108 = vmatprep.subr.mxu0 0.0
    %109 = vmatpush1.msra.mxu0 %v66
    %110 = vmatprep.subr.mxu0 0.0
    %111 = vmatpush1.msra.mxu0 %v65
    %112 = vmatprep.subr.mxu0 0.0
    %113 = vmatpush1.msra.mxu0 %v64
    %114 = vmatprep.subr.mxu0 0.0
    %115 = vmatpush2.msra.mxu0 0.0
    %116 = vmatprep.subr.mxu0 0.0
    %117 = vmatpush2.msra.mxu0 0.0
    %118 = vmatprep.subr.mxu0 0.0
    %119 = vmatpush2.msra.mxu0 0.0
    %120 = vmatprep.subr.mxu0 0.0
    %121 = vmatpush2.msra.mxu0 0.0
    %122 = vmatprep.subr.mxu0 0.0
    %123 = vmatpush2.msra.mxu0 0.0
    %124 = vmatprep.subr.mxu0 0.0
    %125 = vmatpush2.msra.mxu0 0.0
    %126 = vmatprep.subr.mxu0 0.0
    %127 = vmatpush2.msra.mxu0 0.0
    %128 = vmatprep.subr.mxu0 0.0
    %129 = vmatpush2.msra.mxu0 0.0
    %130 = vmatprep.subr.mxu0 0.0
    %131 = vmatpush2.msra.mxu0 0.0
    %132 = vmatprep.subr.mxu0 0.0
    %133 = vmatpush2.msra.mxu0 0.0
    %134 = vmatprep.subr.mxu0 0.0
    %135 = vmatpush2.msra.mxu0 0.0
    %136 = vmatprep.subr.mxu0 0.0
    %137 = vmatpush2.msra.mxu0 0.0
    %138 = vmatprep.subr.mxu0 0.0
    %139 = vmatpush2.msra.mxu0 0.0
    %140 = vmatprep.subr.mxu0 0.0
    %141 = vmatpush2.msra.mxu0 0.0
    %142 = vmatprep.subr.mxu0 0.0
    %143 = vmatpush2.msra.mxu0 0.0
    %144 = vmatprep.subr.mxu0 0.0
    %145 = vmatpush2.msra.mxu0 0.0
    %146 = vmatprep.mubr.f32.mxu0 0.0
    %147 = vmatmul.mubr.f32.gmra.mxu0 %v77
    %v148 = vpop.f32.mrf.mxu0
    %v149 = vadd.f32 %v73, %v148
    %v150 = vpop.f32.mrf.mxu0
    %151 = vmatprep.mubr.f32.mxu0 0.0
    %152 = vmatmul.mubr.f32.gmra.mxu0 %v80
    %v153 = vpop.f32.mrf.mxu0
    %v154 = vadd.f32 %v73, %v153
    %v155 = vpop.f32.mrf.mxu0
    %156 = vdwg.mxu0
    %v157 = vld [vmem:[%s4] sm:$0xff]
    %v158 = vld [vmem:[%s4 + $0x8] sm:$0xff]
    %v159 = vld [vmem:[%s4 + $0x10] sm:$0xff]
    %v160 = vld [vmem:[%s4 + $0x18] sm:$0xff]
    %v161 = vld [vmem:[%s5] sm:$0x1]
    %v163 = vlaneseq
    %v164 = vshrl.u32 %v163, 7
    %v165 = vsub.s32 0, %v164
    %v166 = vrot.slane %v161, %v165
    %168 = vmatprep.subr.mxu0 0.0
    %169 = vmatpush1.msra.mxu0 0.0
    %170 = vmatprep.subr.mxu0 0.0
    %171 = vmatpush1.msra.mxu0 0.0
    %172 = vmatprep.subr.mxu0 0.0
    %173 = vmatpush1.msra.mxu0 0.0
    %174 = vmatprep.subr.mxu0 0.0
    %175 = vmatpush1.msra.mxu0 0.0
    %176 = vmatprep.subr.mxu0 0.0
    %177 = vmatpush1.msra.mxu0 0.0
    %178 = vmatprep.subr.mxu0 0.0
    %179 = vmatpush1.msra.mxu0 0.0
    %180 = vmatprep.subr.mxu0 0.0
    %181 = vmatpush1.msra.mxu0 0.0
    %182 = vmatprep.subr.mxu0 0.0
    %183 = vmatpush1.msra.mxu0 0.0
    %184 = vmatprep.subr.mxu0 0.0
    %185 = vmatpush1.msra.mxu0 0.0
    %186 = vmatprep.subr.mxu0 0.0
    %187 = vmatpush1.msra.mxu0 0.0
    %188 = vmatprep.subr.mxu0 0.0
    %189 = vmatpush1.msra.mxu0 0.0
    %190 = vmatprep.subr.mxu0 0.0
    %191 = vmatpush1.msra.mxu0 0.0
    %192 = vmatprep.subr.mxu0 0.0
    %193 = vmatpush1.msra.mxu0 %v160
    %194 = vmatprep.subr.mxu0 0.0
    %195 = vmatpush1.msra.mxu0 %v159
    %196 = vmatprep.subr.mxu0 0.0
    %197 = vmatpush1.msra.mxu0 %v158
    %198 = vmatprep.subr.mxu0 0.0
    %199 = vmatpush1.msra.mxu0 %v157
    %200 = vmatprep.subr.mxu0 0.0
    %201 = vmatpush2.msra.mxu0 0.0
    %202 = vmatprep.subr.mxu0 0.0
    %203 = vmatpush2.msra.mxu0 0.0
    %204 = vmatprep.subr.mxu0 0.0
    %205 = vmatpush2.msra.mxu0 0.0
    %206 = vmatprep.subr.mxu0 0.0
    %207 = vmatpush2.msra.mxu0 0.0
    %208 = vmatprep.subr.mxu0 0.0
    %209 = vmatpush2.msra.mxu0 0.0
    %210 = vmatprep.subr.mxu0 0.0
    %211 = vmatpush2.msra.mxu0 0.0
    %212 = vmatprep.subr.mxu0 0.0
    %213 = vmatpush2.msra.mxu0 0.0
    %214 = vmatprep.subr.mxu0 0.0
    %215 = vmatpush2.msra.mxu0 0.0
    %216 = vmatprep.subr.mxu0 0.0
    %217 = vmatpush2.msra.mxu0 0.0
    %218 = vmatprep.subr.mxu0 0.0
    %219 = vmatpush2.msra.mxu0 0.0
    %220 = vmatprep.subr.mxu0 0.0
    %221 = vmatpush2.msra.mxu0 0.0
    %222 = vmatprep.subr.mxu0 0.0
    %223 = vmatpush2.msra.mxu0 0.0
    %224 = vmatprep.subr.mxu0 0.0
    %225 = vmatpush2.msra.mxu0 0.0
    %226 = vmatprep.subr.mxu0 0.0
    %227 = vmatpush2.msra.mxu0 0.0
    %228 = vmatprep.subr.mxu0 0.0
    %229 = vmatpush2.msra.mxu0 0.0
    %230 = vmatprep.subr.mxu0 0.0
    %231 = vmatpush2.msra.mxu0 0.0
    %232 = vmatprep.mubr.f32.mxu0 0.0
    %233 = vmatmul.mubr.f32.gmra.mxu0 %v77
    %v234 = vpop.f32.mrf.mxu0
    %v235 = vadd.f32 %v166, %v234
    %v236 = vpop.f32.mrf.mxu0
    %237 = vmatprep.mubr.f32.mxu0 0.0
    %238 = vmatmul.mubr.f32.gmra.mxu0 %v80
    %v239 = vpop.f32.mrf.mxu0
    %v240 = vadd.f32 %v166, %v239
    %v241 = vpop.f32.mrf.mxu0
    %242 = vdwg.mxu0
    %v243 = vld [vmem:[%s6] sm:$0xff]
    %v244 = vld [vmem:[%s6 + $0x8] sm:$0xff]
    %v245 = vld [vmem:[%s6 + $0x10] sm:$0xff]
    %v246 = vld [vmem:[%s6 + $0x18] sm:$0xff]
    %v247 = vld [vmem:[%s7] sm:$0x1]
    %v249 = vlaneseq
    %v250 = vshrl.u32 %v249, 7
    %v251 = vsub.s32 0, %v250
    %v252 = vrot.slane %v247, %v251
    %254 = vmatprep.subr.mxu0 0.0
    %255 = vmatpush1.msra.mxu0 0.0
    %256 = vmatprep.subr.mxu0 0.0
    %257 = vmatpush1.msra.mxu0 0.0
    %258 = vmatprep.subr.mxu0 0.0
    %259 = vmatpush1.msra.mxu0 0.0
    %260 = vmatprep.subr.mxu0 0.0
    %261 = vmatpush1.msra.mxu0 0.0
    %262 = vmatprep.subr.mxu0 0.0
    %263 = vmatpush1.msra.mxu0 0.0
    %264 = vmatprep.subr.mxu0 0.0
    %265 = vmatpush1.msra.mxu0 0.0
    %266 = vmatprep.subr.mxu0 0.0
    %267 = vmatpush1.msra.mxu0 0.0
    %268 = vmatprep.subr.mxu0 0.0
    %269 = vmatpush1.msra.mxu0 0.0
    %270 = vmatprep.subr.mxu0 0.0
    %271 = vmatpush1.msra.mxu0 0.0
    %272 = vmatprep.subr.mxu0 0.0
    %273 = vmatpush1.msra.mxu0 0.0
    %274 = vmatprep.subr.mxu0 0.0
    %275 = vmatpush1.msra.mxu0 0.0
    %276 = vmatprep.subr.mxu0 0.0
    %277 = vmatpush1.msra.mxu0 0.0
    %278 = vmatprep.subr.mxu0 0.0
    %279 = vmatpush1.msra.mxu0 %v246
    %280 = vmatprep.subr.mxu0 0.0
    %281 = vmatpush1.msra.mxu0 %v245
    %282 = vmatprep.subr.mxu0 0.0
    %283 = vmatpush1.msra.mxu0 %v244
    %284 = vmatprep.subr.mxu0 0.0
    %285 = vmatpush1.msra.mxu0 %v243
    %286 = vmatprep.subr.mxu0 0.0
    %287 = vmatpush2.msra.mxu0 0.0
    %288 = vmatprep.subr.mxu0 0.0
    %289 = vmatpush2.msra.mxu0 0.0
    %290 = vmatprep.subr.mxu0 0.0
    %291 = vmatpush2.msra.mxu0 0.0
    %292 = vmatprep.subr.mxu0 0.0
    %293 = vmatpush2.msra.mxu0 0.0
    %294 = vmatprep.subr.mxu0 0.0
    %295 = vmatpush2.msra.mxu0 0.0
    %296 = vmatprep.subr.mxu0 0.0
    %297 = vmatpush2.msra.mxu0 0.0
    %298 = vmatprep.subr.mxu0 0.0
    %299 = vmatpush2.msra.mxu0 0.0
    %300 = vmatprep.subr.mxu0 0.0
    %301 = vmatpush2.msra.mxu0 0.0
    %302 = vmatprep.subr.mxu0 0.0
    %303 = vmatpush2.msra.mxu0 0.0
    %304 = vmatprep.subr.mxu0 0.0
    %305 = vmatpush2.msra.mxu0 0.0
    %306 = vmatprep.subr.mxu0 0.0
    %307 = vmatpush2.msra.mxu0 0.0
    %308 = vmatprep.subr.mxu0 0.0
    %309 = vmatpush2.msra.mxu0 0.0
    %310 = vmatprep.subr.mxu0 0.0
    %311 = vmatpush2.msra.mxu0 0.0
    %312 = vmatprep.subr.mxu0 0.0
    %313 = vmatpush2.msra.mxu0 0.0
    %314 = vmatprep.subr.mxu0 0.0
    %315 = vmatpush2.msra.mxu0 0.0
    %316 = vmatprep.subr.mxu0 0.0
    %317 = vmatpush2.msra.mxu0 0.0
    %318 = vmatprep.mubr.f32.mxu0 0.0
    %319 = vmatmul.mubr.f32.gmra.mxu0 %v77
    %v320 = vpop.f32.mrf.mxu0
    %v321 = vadd.f32 %v252, %v320
    %v322 = vpop.f32.mrf.mxu0
    %323 = vmatprep.mubr.f32.mxu0 0.0
    %324 = vmatmul.mubr.f32.gmra.mxu0 %v80
    %v325 = vpop.f32.mrf.mxu0
    %v326 = vadd.f32 %v252, %v325
    %v327 = vpop.f32.mrf.mxu0
    %328 = vdwg.mxu0
    %v329 = vld [vmem:[#allocation5] sm:$0x3]
    %v332 = vunpack.c.l.s4 1966171168
    %v333 = vunpack.c.0.s8 %v332
    %v334 = vlaneseq
    %v335 = vshrl.u32 %v334, 7
    %v336 = vsub.s32 %v333, %v335
    %v337 = vrot.slane %v329, %v336
    %v338 = vcombine.high %v337, %v337
    %v340 = vunpack.c.l.s4 1966171168
    %v341 = vunpack.c.0.s8 %v340
    %v342 = vlaneseq
    %v343 = vshrl.u32 %v342, 7
    %v344 = vsub.s32 %v341, %v343
    %v345 = vrot.slane %v337, %v344
    %v347 = vunpack.c.l.s4 1966171168
    %v348 = vunpack.c.0.s8 %v347
    %v349 = vlaneseq
    %v350 = vshrl.u32 %v349, 7
    %v351 = vsub.s32 %v348, %v350
    %v352 = vrot.slane %v338, %v351
    %vm353 = vcmask 130048
    %v355 = vsel %vm353, %v149, 0
    %v358 = vsel %vm353, %v235, 0
    %360 = vmatprep.subr.mxu0 0.0
    %361 = vmatpush1.xpose.msra.mxu0 0.0
    %362 = vmatprep.subr.mxu0 0.0
    %363 = vmatpush1.xpose.msra.mxu0 0.0
    %364 = vmatprep.subr.mxu0 0.0
    %365 = vmatpush1.xpose.msra.mxu0 0.0
    %366 = vmatprep.subr.mxu0 0.0
    %367 = vmatpush1.xpose.msra.mxu0 0.0
    %368 = vmatprep.subr.mxu0 0.0
    %369 = vmatpush1.xpose.msra.mxu0 0.0
    %370 = vmatprep.subr.mxu0 0.0
    %371 = vmatpush1.xpose.msra.mxu0 0.0
    %372 = vmatprep.subr.mxu0 0.0
    %373 = vmatpush1.xpose.msra.mxu0 0.0
    %374 = vmatprep.subr.mxu0 0.0
    %375 = vmatpush1.xpose.msra.mxu0 0.0
    %376 = vmatprep.subr.mxu0 0.0
    %377 = vmatpush1.xpose.msra.mxu0 0.0
    %378 = vmatprep.subr.mxu0 0.0
    %379 = vmatpush1.xpose.msra.mxu0 0.0
    %380 = vmatprep.subr.mxu0 0.0
    %381 = vmatpush1.xpose.msra.mxu0 0.0
    %382 = vmatprep.subr.mxu0 0.0
    %383 = vmatpush1.xpose.msra.mxu0 0.0
    %384 = vmatprep.subr.mxu0 0.0
    %385 = vmatpush1.xpose.msra.mxu0 0.0
    %386 = vmatprep.subr.mxu0 0.0
    %387 = vmatpush1.xpose.msra.mxu0 0.0
    %388 = vmatprep.subr.mxu0 0.0
    %389 = vmatpush1.xpose.msra.mxu0 0.0
    %390 = vmatprep.subr.mxu0 0.0
    %391 = vmatpush1.xpose.msra.mxu0 %v358
    %392 = vmatprep.subr.mxu0 0.0
    %393 = vmatpush2.xpose.msra.mxu0 0.0
    %394 = vmatprep.subr.mxu0 0.0
    %395 = vmatpush2.xpose.msra.mxu0 0.0
    %396 = vmatprep.subr.mxu0 0.0
    %397 = vmatpush2.xpose.msra.mxu0 0.0
    %398 = vmatprep.subr.mxu0 0.0
    %399 = vmatpush2.xpose.msra.mxu0 0.0
    %400 = vmatprep.subr.mxu0 0.0
    %401 = vmatpush2.xpose.msra.mxu0 0.0
    %402 = vmatprep.subr.mxu0 0.0
    %403 = vmatpush2.xpose.msra.mxu0 0.0
    %404 = vmatprep.subr.mxu0 0.0
    %405 = vmatpush2.xpose.msra.mxu0 0.0
    %406 = vmatprep.subr.mxu0 0.0
    %407 = vmatpush2.xpose.msra.mxu0 0.0
    %408 = vmatprep.subr.mxu0 0.0
    %409 = vmatpush2.xpose.msra.mxu0 0.0
    %410 = vmatprep.subr.mxu0 0.0
    %411 = vmatpush2.xpose.msra.mxu0 0.0
    %412 = vmatprep.subr.mxu0 0.0
    %413 = vmatpush2.xpose.msra.mxu0 0.0
    %414 = vmatprep.subr.mxu0 0.0
    %415 = vmatpush2.xpose.msra.mxu0 0.0
    %416 = vmatprep.subr.mxu0 0.0
    %417 = vmatpush2.xpose.msra.mxu0 0.0
    %418 = vmatprep.subr.mxu0 0.0
    %419 = vmatpush2.xpose.msra.mxu0 0.0
    %420 = vmatprep.subr.mxu0 0.0
    %421 = vmatpush2.xpose.msra.mxu0 0.0
    %422 = vmatprep.subr.mxu0 0.0
    %423 = vmatpush2.xpose.msra.mxu0 0.0
    %424 = vmatprep.mubr.f32.mxu0 0.0
    %425 = vmatmul.mubr.f32.gmra.mxu0 %v355
    %v426 = vpop.f32.mrf.mxu0
    %v427 = vadd.f32 0.0, %v426
    %v428 = vpop.f32.mrf.mxu0
    %429 = vdwg.mxu0
    %v431 = vsel %vm353, %v154, 0
    %v434 = vsel %vm353, %v240, 0
    %436 = vmatprep.subr.mxu0 0.0
    %437 = vmatpush1.xpose.msra.mxu0 0.0
    %438 = vmatprep.subr.mxu0 0.0
    %439 = vmatpush1.xpose.msra.mxu0 0.0
    %440 = vmatprep.subr.mxu0 0.0
    %441 = vmatpush1.xpose.msra.mxu0 0.0
    %442 = vmatprep.subr.mxu0 0.0
    %443 = vmatpush1.xpose.msra.mxu0 0.0
    %444 = vmatprep.subr.mxu0 0.0
    %445 = vmatpush1.xpose.msra.mxu0 0.0
    %446 = vmatprep.subr.mxu0 0.0
    %447 = vmatpush1.xpose.msra.mxu0 0.0
    %448 = vmatprep.subr.mxu0 0.0
    %449 = vmatpush1.xpose.msra.mxu0 0.0
    %450 = vmatprep.subr.mxu0 0.0
    %451 = vmatpush1.xpose.msra.mxu0 0.0
    %452 = vmatprep.subr.mxu0 0.0
    %453 = vmatpush1.xpose.msra.mxu0 0.0
    %454 = vmatprep.subr.mxu0 0.0
    %455 = vmatpush1.xpose.msra.mxu0 0.0
    %456 = vmatprep.subr.mxu0 0.0
    %457 = vmatpush1.xpose.msra.mxu0 0.0
    %458 = vmatprep.subr.mxu0 0.0
    %459 = vmatpush1.xpose.msra.mxu0 0.0
    %460 = vmatprep.subr.mxu0 0.0
    %461 = vmatpush1.xpose.msra.mxu0 0.0
    %462 = vmatprep.subr.mxu0 0.0
    %463 = vmatpush1.xpose.msra.mxu0 0.0
    %464 = vmatprep.subr.mxu0 0.0
    %465 = vmatpush1.xpose.msra.mxu0 0.0
    %466 = vmatprep.subr.mxu0 0.0
    %467 = vmatpush1.xpose.msra.mxu0 %v434
    %468 = vmatprep.subr.mxu0 0.0
    %469 = vmatpush2.xpose.msra.mxu0 0.0
    %470 = vmatprep.subr.mxu0 0.0
    %471 = vmatpush2.xpose.msra.mxu0 0.0
    %472 = vmatprep.subr.mxu0 0.0
    %473 = vmatpush2.xpose.msra.mxu0 0.0
    %474 = vmatprep.subr.mxu0 0.0
    %475 = vmatpush2.xpose.msra.mxu0 0.0
    %476 = vmatprep.subr.mxu0 0.0
    %477 = vmatpush2.xpose.msra.mxu0 0.0
    %478 = vmatprep.subr.mxu0 0.0
    %479 = vmatpush2.xpose.msra.mxu0 0.0
    %480 = vmatprep.subr.mxu0 0.0
    %481 = vmatpush2.xpose.msra.mxu0 0.0
    %482 = vmatprep.subr.mxu0 0.0
    %483 = vmatpush2.xpose.msra.mxu0 0.0
    %484 = vmatprep.subr.mxu0 0.0
    %485 = vmatpush2.xpose.msra.mxu0 0.0
    %486 = vmatprep.subr.mxu0 0.0
    %487 = vmatpush2.xpose.msra.mxu0 0.0
    %488 = vmatprep.subr.mxu0 0.0
    %489 = vmatpush2.xpose.msra.mxu0 0.0
    %490 = vmatprep.subr.mxu0 0.0
    %491 = vmatpush2.xpose.msra.mxu0 0.0
    %492 = vmatprep.subr.mxu0 0.0
    %493 = vmatpush2.xpose.msra.mxu0 0.0
    %494 = vmatprep.subr.mxu0 0.0
    %495 = vmatpush2.xpose.msra.mxu0 0.0
    %496 = vmatprep.subr.mxu0 0.0
    %497 = vmatpush2.xpose.msra.mxu0 0.0
    %498 = vmatprep.subr.mxu0 0.0
    %499 = vmatpush2.xpose.msra.mxu0 0.0
    %500 = vmatprep.mubr.f32.mxu0 0.0
    %501 = vmatmul.mubr.f32.gmra.mxu0 %v431
    %v502 = vpop.f32.mrf.mxu0
    %v503 = vadd.f32 0.0, %v502
    %v504 = vpop.f32.mrf.mxu0
    %505 = vdwg.mxu0
    %v506 = vmul.f32 %v427, 0.25
    %v507 = vmul.f32 %v503, 0.25
    %v508 = vmul.f32 %v506, 1.442695
    %v509 = vpow.pop %v508
    %v510 = vmul.f32 %v507, 1.442695
    %v511 = vpow.pop %v510
    %v512 = vlaneseq
    %v513 = vshrl.u32 %v512, 7
    %v514 = vsub.s32 0, %v513
    %v515 = vrot.slane %v345, %v514
    %v516 = vlaneseq
    %v517 = vshrl.u32 %v516, 7
    %v518 = vsub.s32 0, %v517
    %v519 = vrot.slane %v352, %v518
    %v522 = vmul.f32 %v509, %v515
    %v523 = vmul.f32 %v511, %v519
    %vm524 = vcmask 64512
    %v525 = vsel %vm524, %v522, 0.0
    %526 = vadd.xlane.f32.xlu0 %v525
    %v527 = vpop.xlane.xlu0 %526
    %v528 = vsel %vm524, %v523, 0.0
    %529 = vadd.xlane.f32.xlu0 %v528
    %v530 = vpop.xlane.xlu0 %529
    %v531 = vadd.f32 %v527, 1e-08
    %v532 = vadd.f32 %v530, 1e-08
    %v533 = vrcp.pop %v531
    %v534 = vmul.f32 %v522, %v533
    %v535 = vrcp.pop %v532
    %v536 = vmul.f32 %v523, %v535
    %v538 = vsel %vm524, %v534, 0
    %540 = vmatprep.subr.mxu0 0.0
    %541 = vmatpush1.msra.mxu0 0.0
    %542 = vmatprep.subr.mxu0 0.0
    %543 = vmatpush1.msra.mxu0 0.0
    %544 = vmatprep.subr.mxu0 0.0
    %545 = vmatpush1.msra.mxu0 0.0
    %546 = vmatprep.subr.mxu0 0.0
    %547 = vmatpush1.msra.mxu0 0.0
    %548 = vmatprep.subr.mxu0 0.0
    %549 = vmatpush1.msra.mxu0 0.0
    %550 = vmatprep.subr.mxu0 0.0
    %551 = vmatpush1.msra.mxu0 0.0
    %552 = vmatprep.subr.mxu0 0.0
    %553 = vmatpush1.msra.mxu0 0.0
    %554 = vmatprep.subr.mxu0 0.0
    %555 = vmatpush1.msra.mxu0 0.0
    %556 = vmatprep.subr.mxu0 0.0
    %557 = vmatpush1.msra.mxu0 0.0
    %558 = vmatprep.subr.mxu0 0.0
    %559 = vmatpush1.msra.mxu0 0.0
    %560 = vmatprep.subr.mxu0 0.0
    %561 = vmatpush1.msra.mxu0 0.0
    %562 = vmatprep.subr.mxu0 0.0
    %563 = vmatpush1.msra.mxu0 0.0
    %564 = vmatprep.subr.mxu0 0.0
    %565 = vmatpush1.msra.mxu0 0.0
    %566 = vmatprep.subr.mxu0 0.0
    %567 = vmatpush1.msra.mxu0 0.0
    %568 = vmatprep.subr.mxu0 0.0
    %569 = vmatpush1.msra.mxu0 0.0
    %570 = vmatprep.subr.mxu0 0.0
    %571 = vmatpush1.msra.mxu0 %v321
    %572 = vmatprep.subr.mxu0 0.0
    %573 = vmatpush2.msra.mxu0 0.0
    %574 = vmatprep.subr.mxu0 0.0
    %575 = vmatpush2.msra.mxu0 0.0
    %576 = vmatprep.subr.mxu0 0.0
    %577 = vmatpush2.msra.mxu0 0.0
    %578 = vmatprep.subr.mxu0 0.0
    %579 = vmatpush2.msra.mxu0 0.0
    %580 = vmatprep.subr.mxu0 0.0
    %581 = vmatpush2.msra.mxu0 0.0
    %582 = vmatprep.subr.mxu0 0.0
    %583 = vmatpush2.msra.mxu0 0.0
    %584 = vmatprep.subr.mxu0 0.0
    %585 = vmatpush2.msra.mxu0 0.0
    %586 = vmatprep.subr.mxu0 0.0
    %587 = vmatpush2.msra.mxu0 0.0
    %588 = vmatprep.subr.mxu0 0.0
    %589 = vmatpush2.msra.mxu0 0.0
    %590 = vmatprep.subr.mxu0 0.0
    %591 = vmatpush2.msra.mxu0 0.0
    %592 = vmatprep.subr.mxu0 0.0
    %593 = vmatpush2.msra.mxu0 0.0
    %594 = vmatprep.subr.mxu0 0.0
    %595 = vmatpush2.msra.mxu0 0.0
    %596 = vmatprep.subr.mxu0 0.0
    %597 = vmatpush2.msra.mxu0 0.0
    %598 = vmatprep.subr.mxu0 0.0
    %599 = vmatpush2.msra.mxu0 0.0
    %600 = vmatprep.subr.mxu0 0.0
    %601 = vmatpush2.msra.mxu0 0.0
    %602 = vmatprep.subr.mxu0 0.0
    %603 = vmatpush2.msra.mxu0 0.0
    %604 = vmatprep.mubr.f32.mxu0 0.0
    %605 = vmatmul.mubr.f32.gmra.mxu0 %v538
    %v606 = vpop.f32.mrf.mxu0
    %v607 = vadd.f32 0.0, %v606
    %v608 = vpop.f32.mrf.mxu0
    %609 = vdwg.mxu0
    %v611 = vsel %vm524, %v536, 0
    %613 = vmatprep.subr.mxu0 0.0
    %614 = vmatpush1.msra.mxu0 0.0
    %615 = vmatprep.subr.mxu0 0.0
    %616 = vmatpush1.msra.mxu0 0.0
    %617 = vmatprep.subr.mxu0 0.0
    %618 = vmatpush1.msra.mxu0 0.0
    %619 = vmatprep.subr.mxu0 0.0
    %620 = vmatpush1.msra.mxu0 0.0
    %621 = vmatprep.subr.mxu0 0.0
    %622 = vmatpush1.msra.mxu0 0.0
    %623 = vmatprep.subr.mxu0 0.0
    %624 = vmatpush1.msra.mxu0 0.0
    %625 = vmatprep.subr.mxu0 0.0
    %626 = vmatpush1.msra.mxu0 0.0
    %627 = vmatprep.subr.mxu0 0.0
    %628 = vmatpush1.msra.mxu0 0.0
    %629 = vmatprep.subr.mxu0 0.0
    %630 = vmatpush1.msra.mxu0 0.0
    %631 = vmatprep.subr.mxu0 0.0
    %632 = vmatpush1.msra.mxu0 0.0
    %633 = vmatprep.subr.mxu0 0.0
    %634 = vmatpush1.msra.mxu0 0.0
    %635 = vmatprep.subr.mxu0 0.0
    %636 = vmatpush1.msra.mxu0 0.0
    %637 = vmatprep.subr.mxu0 0.0
    %638 = vmatpush1.msra.mxu0 0.0
    %639 = vmatprep.subr.mxu0 0.0
    %640 = vmatpush1.msra.mxu0 0.0
    %641 = vmatprep.subr.mxu0 0.0
    %642 = vmatpush1.msra.mxu0 0.0
    %643 = vmatprep.subr.mxu0 0.0
    %644 = vmatpush1.msra.mxu0 %v326
    %645 = vmatprep.subr.mxu0 0.0
    %646 = vmatpush2.msra.mxu0 0.0
    %647 = vmatprep.subr.mxu0 0.0
    %648 = vmatpush2.msra.mxu0 0.0
    %649 = vmatprep.subr.mxu0 0.0
    %650 = vmatpush2.msra.mxu0 0.0
    %651 = vmatprep.subr.mxu0 0.0
    %652 = vmatpush2.msra.mxu0 0.0
    %653 = vmatprep.subr.mxu0 0.0
    %654 = vmatpush2.msra.mxu0 0.0
    %655 = vmatprep.subr.mxu0 0.0
    %656 = vmatpush2.msra.mxu0 0.0
    %657 = vmatprep.subr.mxu0 0.0
    %658 = vmatpush2.msra.mxu0 0.0
    %659 = vmatprep.subr.mxu0 0.0
    %660 = vmatpush2.msra.mxu0 0.0
    %661 = vmatprep.subr.mxu0 0.0
    %662 = vmatpush2.msra.mxu0 0.0
    %663 = vmatprep.subr.mxu0 0.0
    %664 = vmatpush2.msra.mxu0 0.0
    %665 = vmatprep.subr.mxu0 0.0
    %666 = vmatpush2.msra.mxu0 0.0
    %667 = vmatprep.subr.mxu0 0.0
    %668 = vmatpush2.msra.mxu0 0.0
    %669 = vmatprep.subr.mxu0 0.0
    %670 = vmatpush2.msra.mxu0 0.0
    %671 = vmatprep.subr.mxu0 0.0
    %672 = vmatpush2.msra.mxu0 0.0
    %673 = vmatprep.subr.mxu0 0.0
    %674 = vmatpush2.msra.mxu0 0.0
    %675 = vmatprep.subr.mxu0 0.0
    %676 = vmatpush2.msra.mxu0 0.0
    %677 = vmatprep.mubr.f32.mxu0 0.0
    %678 = vmatmul.mubr.f32.gmra.mxu0 %v611
    %v679 = vpop.f32.mrf.mxu0
    %v680 = vadd.f32 0.0, %v679
    %v681 = vpop.f32.mrf.mxu0
    %682 = vdwg.mxu0
    %683 = vrot.lane.b32.xlu0 %v149, 112
    %v684 = vpop.permute.xlu0 %683
    %685 = vrot.lane.b32.xlu0 %v235, 112
    %v686 = vpop.permute.xlu0 %685
    %v687 = vsel %vm353, %v684, 0
    %v689 = vsel %vm353, %v686, 0
    %691 = vmatprep.subr.mxu0 0.0
    %692 = vmatpush1.xpose.msra.mxu0 0.0
    %693 = vmatprep.subr.mxu0 0.0
    %694 = vmatpush1.xpose.msra.mxu0 0.0
    %695 = vmatprep.subr.mxu0 0.0
    %696 = vmatpush1.xpose.msra.mxu0 0.0
    %697 = vmatprep.subr.mxu0 0.0
    %698 = vmatpush1.xpose.msra.mxu0 0.0
    %699 = vmatprep.subr.mxu0 0.0
    %700 = vmatpush1.xpose.msra.mxu0 0.0
    %701 = vmatprep.subr.mxu0 0.0
    %702 = vmatpush1.xpose.msra.mxu0 0.0
    %703 = vmatprep.subr.mxu0 0.0
    %704 = vmatpush1.xpose.msra.mxu0 0.0
    %705 = vmatprep.subr.mxu0 0.0
    %706 = vmatpush1.xpose.msra.mxu0 0.0
    %707 = vmatprep.subr.mxu0 0.0
    %708 = vmatpush1.xpose.msra.mxu0 0.0
    %709 = vmatprep.subr.mxu0 0.0
    %710 = vmatpush1.xpose.msra.mxu0 0.0
    %711 = vmatprep.subr.mxu0 0.0
    %712 = vmatpush1.xpose.msra.mxu0 0.0
    %713 = vmatprep.subr.mxu0 0.0
    %714 = vmatpush1.xpose.msra.mxu0 0.0
    %715 = vmatprep.subr.mxu0 0.0
    %716 = vmatpush1.xpose.msra.mxu0 0.0
    %717 = vmatprep.subr.mxu0 0.0
    %718 = vmatpush1.xpose.msra.mxu0 0.0
    %719 = vmatprep.subr.mxu0 0.0
    %720 = vmatpush1.xpose.msra.mxu0 0.0
    %721 = vmatprep.subr.mxu0 0.0
    %722 = vmatpush1.xpose.msra.mxu0 %v689
    %723 = vmatprep.subr.mxu0 0.0
    %724 = vmatpush2.xpose.msra.mxu0 0.0
    %725 = vmatprep.subr.mxu0 0.0
    %726 = vmatpush2.xpose.msra.mxu0 0.0
    %727 = vmatprep.subr.mxu0 0.0
    %728 = vmatpush2.xpose.msra.mxu0 0.0
    %729 = vmatprep.subr.mxu0 0.0
    %730 = vmatpush2.xpose.msra.mxu0 0.0
    %731 = vmatprep.subr.mxu0 0.0
    %732 = vmatpush2.xpose.msra.mxu0 0.0
    %733 = vmatprep.subr.mxu0 0.0
    %734 = vmatpush2.xpose.msra.mxu0 0.0
    %735 = vmatprep.subr.mxu0 0.0
    %736 = vmatpush2.xpose.msra.mxu0 0.0
    %737 = vmatprep.subr.mxu0 0.0
    %738 = vmatpush2.xpose.msra.mxu0 0.0
    %739 = vmatprep.subr.mxu0 0.0
    %740 = vmatpush2.xpose.msra.mxu0 0.0
    %741 = vmatprep.subr.mxu0 0.0
    %742 = vmatpush2.xpose.msra.mxu0 0.0
    %743 = vmatprep.subr.mxu0 0.0
    %744 = vmatpush2.xpose.msra.mxu0 0.0
    %745 = vmatprep.subr.mxu0 0.0
    %746 = vmatpush2.xpose.msra.mxu0 0.0
    %747 = vmatprep.subr.mxu0 0.0
    %748 = vmatpush2.xpose.msra.mxu0 0.0
    %749 = vmatprep.subr.mxu0 0.0
    %750 = vmatpush2.xpose.msra.mxu0 0.0
    %751 = vmatprep.subr.mxu0 0.0
    %752 = vmatpush2.xpose.msra.mxu0 0.0
    %753 = vmatprep.subr.mxu0 0.0
    %754 = vmatpush2.xpose.msra.mxu0 0.0
    %755 = vmatprep.mubr.f32.mxu0 0.0
    %756 = vmatmul.mubr.f32.gmra.mxu0 %v687
    %v757 = vpop.f32.mrf.mxu0
    %v758 = vadd.f32 0.0, %v757
    %v759 = vpop.f32.mrf.mxu0
    %760 = vdwg.mxu0
    %761 = vrot.lane.b32.xlu0 %v154, 112
    %v762 = vpop.permute.xlu0 %761
    %763 = vrot.lane.b32.xlu0 %v240, 112
    %v764 = vpop.permute.xlu0 %763
    %v765 = vsel %vm353, %v762, 0
    %v767 = vsel %vm353, %v764, 0
    %769 = vmatprep.subr.mxu0 0.0
    %770 = vmatpush1.xpose.msra.mxu0 0.0
    %771 = vmatprep.subr.mxu0 0.0
    %772 = vmatpush1.xpose.msra.mxu0 0.0
    %773 = vmatprep.subr.mxu0 0.0
    %774 = vmatpush1.xpose.msra.mxu0 0.0
    %775 = vmatprep.subr.mxu0 0.0
    %776 = vmatpush1.xpose.msra.mxu0 0.0
    %777 = vmatprep.subr.mxu0 0.0
    %778 = vmatpush1.xpose.msra.mxu0 0.0
    %779 = vmatprep.subr.mxu0 0.0
    %780 = vmatpush1.xpose.msra.mxu0 0.0
    %781 = vmatprep.subr.mxu0 0.0
    %782 = vmatpush1.xpose.msra.mxu0 0.0
    %783 = vmatprep.subr.mxu0 0.0
    %784 = vmatpush1.xpose.msra.mxu0 0.0
    %785 = vmatprep.subr.mxu0 0.0
    %786 = vmatpush1.xpose.msra.mxu0 0.0
    %787 = vmatprep.subr.mxu0 0.0
    %788 = vmatpush1.xpose.msra.mxu0 0.0
    %789 = vmatprep.subr.mxu0 0.0
    %790 = vmatpush1.xpose.msra.mxu0 0.0
    %791 = vmatprep.subr.mxu0 0.0
    %792 = vmatpush1.xpose.msra.mxu0 0.0
    %793 = vmatprep.subr.mxu0 0.0
    %794 = vmatpush1.xpose.msra.mxu0 0.0
    %795 = vmatprep.subr.mxu0 0.0
    %796 = vmatpush1.xpose.msra.mxu0 0.0
    %797 = vmatprep.subr.mxu0 0.0
    %798 = vmatpush1.xpose.msra.mxu0 0.0
    %799 = vmatprep.subr.mxu0 0.0
    %800 = vmatpush1.xpose.msra.mxu0 %v767
    %801 = vmatprep.subr.mxu0 0.0
    %802 = vmatpush2.xpose.msra.mxu0 0.0
    %803 = vmatprep.subr.mxu0 0.0
    %804 = vmatpush2.xpose.msra.mxu0 0.0
    %805 = vmatprep.subr.mxu0 0.0
    %806 = vmatpush2.xpose.msra.mxu0 0.0
    %807 = vmatprep.subr.mxu0 0.0
    %808 = vmatpush2.xpose.msra.mxu0 0.0
    %809 = vmatprep.subr.mxu0 0.0
    %810 = vmatpush2.xpose.msra.mxu0 0.0
    %811 = vmatprep.subr.mxu0 0.0
    %812 = vmatpush2.xpose.msra.mxu0 0.0
    %813 = vmatprep.subr.mxu0 0.0
    %814 = vmatpush2.xpose.msra.mxu0 0.0
    %815 = vmatprep.subr.mxu0 0.0
    %816 = vmatpush2.xpose.msra.mxu0 0.0
    %817 = vmatprep.subr.mxu0 0.0
    %818 = vmatpush2.xpose.msra.mxu0 0.0
    %819 = vmatprep.subr.mxu0 0.0
    %820 = vmatpush2.xpose.msra.mxu0 0.0
    %821 = vmatprep.subr.mxu0 0.0
    %822 = vmatpush2.xpose.msra.mxu0 0.0
    %823 = vmatprep.subr.mxu0 0.0
    %824 = vmatpush2.xpose.msra.mxu0 0.0
    %825 = vmatprep.subr.mxu0 0.0
    %826 = vmatpush2.xpose.msra.mxu0 0.0
    %827 = vmatprep.subr.mxu0 0.0
    %828 = vmatpush2.xpose.msra.mxu0 0.0
    %829 = vmatprep.subr.mxu0 0.0
    %830 = vmatpush2.xpose.msra.mxu0 0.0
    %831 = vmatprep.subr.mxu0 0.0
    %832 = vmatpush2.xpose.msra.mxu0 0.0
    %833 = vmatprep.mubr.f32.mxu0 0.0
    %834 = vmatmul.mubr.f32.gmra.mxu0 %v765
    %v835 = vpop.f32.mrf.mxu0
    %v836 = vadd.f32 0.0, %v835
    %v837 = vpop.f32.mrf.mxu0
    %838 = vdwg.mxu0
    %v839 = vmul.f32 %v758, 0.25
    %v840 = vmul.f32 %v836, 0.25
    %v841 = vmul.f32 %v839, 1.442695
    %v842 = vpow.pop %v841
    %v843 = vmul.f32 %v840, 1.442695
    %v844 = vpow.pop %v843
    %v845 = vmul.f32 %v842, %v515
    %v846 = vmul.f32 %v844, %v519
    %v847 = vsel %vm524, %v845, 0.0
    %848 = vadd.xlane.f32.xlu0 %v847
    %v849 = vpop.xlane.xlu0 %848
    %v850 = vsel %vm524, %v846, 0.0
    %851 = vadd.xlane.f32.xlu0 %v850
    %v852 = vpop.xlane.xlu0 %851
    %v853 = vadd.f32 %v849, 1e-08
    %v854 = vadd.f32 %v852, 1e-08
    %v855 = vrcp.pop %v853
    %v856 = vmul.f32 %v845, %v855
    %v857 = vrcp.pop %v854
    %v858 = vmul.f32 %v846, %v857
    %860 = vrot.lane.b32.xlu0 %v321, 112
    %v861 = vpop.permute.xlu0 %860
    %v864 = vsel %vm524, %v856, 0
    %866 = vmatprep.subr.mxu0 0.0
    %867 = vmatpush1.msra.mxu0 0.0
    %868 = vmatprep.subr.mxu0 0.0
    %869 = vmatpush1.msra.mxu0 0.0
    %870 = vmatprep.subr.mxu0 0.0
    %871 = vmatpush1.msra.mxu0 0.0
    %872 = vmatprep.subr.mxu0 0.0
    %873 = vmatpush1.msra.mxu0 0.0
    %874 = vmatprep.subr.mxu0 0.0
    %875 = vmatpush1.msra.mxu0 0.0
    %876 = vmatprep.subr.mxu0 0.0
    %877 = vmatpush1.msra.mxu0 0.0
    %878 = vmatprep.subr.mxu0 0.0
    %879 = vmatpush1.msra.mxu0 0.0
    %880 = vmatprep.subr.mxu0 0.0
    %881 = vmatpush1.msra.mxu0 0.0
    %882 = vmatprep.subr.mxu0 0.0
    %883 = vmatpush1.msra.mxu0 0.0
    %884 = vmatprep.subr.mxu0 0.0
    %885 = vmatpush1.msra.mxu0 0.0
    %886 = vmatprep.subr.mxu0 0.0
    %887 = vmatpush1.msra.mxu0 0.0
    %888 = vmatprep.subr.mxu0 0.0
    %889 = vmatpush1.msra.mxu0 0.0
    %890 = vmatprep.subr.mxu0 0.0
    %891 = vmatpush1.msra.mxu0 0.0
    %892 = vmatprep.subr.mxu0 0.0
    %893 = vmatpush1.msra.mxu0 0.0
    %894 = vmatprep.subr.mxu0 0.0
    %895 = vmatpush1.msra.mxu0 0.0
    %896 = vmatprep.subr.mxu0 0.0
    %897 = vmatpush1.msra.mxu0 %v861
    %898 = vmatprep.subr.mxu0 0.0
    %899 = vmatpush2.msra.mxu0 0.0
    %900 = vmatprep.subr.mxu0 0.0
    %901 = vmatpush2.msra.mxu0 0.0
    %902 = vmatprep.subr.mxu0 0.0
    %903 = vmatpush2.msra.mxu0 0.0
    %904 = vmatprep.subr.mxu0 0.0
    %905 = vmatpush2.msra.mxu0 0.0
    %906 = vmatprep.subr.mxu0 0.0
    %907 = vmatpush2.msra.mxu0 0.0
    %908 = vmatprep.subr.mxu0 0.0
    %909 = vmatpush2.msra.mxu0 0.0
    %910 = vmatprep.subr.mxu0 0.0
    %911 = vmatpush2.msra.mxu0 0.0
    %912 = vmatprep.subr.mxu0 0.0
    %913 = vmatpush2.msra.mxu0 0.0
    %914 = vmatprep.subr.mxu0 0.0
    %915 = vmatpush2.msra.mxu0 0.0
    %916 = vmatprep.subr.mxu0 0.0
    %917 = vmatpush2.msra.mxu0 0.0
    %918 = vmatprep.subr.mxu0 0.0
    %919 = vmatpush2.msra.mxu0 0.0
    %920 = vmatprep.subr.mxu0 0.0
    %921 = vmatpush2.msra.mxu0 0.0
    %922 = vmatprep.subr.mxu0 0.0
    %923 = vmatpush2.msra.mxu0 0.0
    %924 = vmatprep.subr.mxu0 0.0
    %925 = vmatpush2.msra.mxu0 0.0
    %926 = vmatprep.subr.mxu0 0.0
    %927 = vmatpush2.msra.mxu0 0.0
    %928 = vmatprep.subr.mxu0 0.0
    %929 = vmatpush2.msra.mxu0 0.0
    %930 = vmatprep.mubr.f32.mxu0 0.0
    %931 = vmatmul.mubr.f32.gmra.mxu0 %v864
    %v932 = vpop.f32.mrf.mxu0
    %v933 = vadd.f32 0.0, %v932
    %v934 = vpop.f32.mrf.mxu0
    %935 = vdwg.mxu0
    %937 = vrot.lane.b32.xlu0 %v326, 112
    %v938 = vpop.permute.xlu0 %937
    %v941 = vsel %vm524, %v858, 0
    %943 = vmatprep.subr.mxu0 0.0
    %944 = vmatpush1.msra.mxu0 0.0
    %945 = vmatprep.subr.mxu0 0.0
    %946 = vmatpush1.msra.mxu0 0.0
    %947 = vmatprep.subr.mxu0 0.0
    %948 = vmatpush1.msra.mxu0 0.0
    %949 = vmatprep.subr.mxu0 0.0
    %950 = vmatpush1.msra.mxu0 0.0
    %951 = vmatprep.subr.mxu0 0.0
    %952 = vmatpush1.msra.mxu0 0.0
    %953 = vmatprep.subr.mxu0 0.0
    %954 = vmatpush1.msra.mxu0 0.0
    %955 = vmatprep.subr.mxu0 0.0
    %956 = vmatpush1.msra.mxu0 0.0
    %957 = vmatprep.subr.mxu0 0.0
    %958 = vmatpush1.msra.mxu0 0.0
    %959 = vmatprep.subr.mxu0 0.0
    %960 = vmatpush1.msra.mxu0 0.0
    %961 = vmatprep.subr.mxu0 0.0
    %962 = vmatpush1.msra.mxu0 0.0
    %963 = vmatprep.subr.mxu0 0.0
    %964 = vmatpush1.msra.mxu0 0.0
    %965 = vmatprep.subr.mxu0 0.0
    %966 = vmatpush1.msra.mxu0 0.0
    %967 = vmatprep.subr.mxu0 0.0
    %968 = vmatpush1.msra.mxu0 0.0
    %969 = vmatprep.subr.mxu0 0.0
    %970 = vmatpush1.msra.mxu0 0.0
    %971 = vmatprep.subr.mxu0 0.0
    %972 = vmatpush1.msra.mxu0 0.0
    %973 = vmatprep.subr.mxu0 0.0
    %974 = vmatpush1.msra.mxu0 %v938
    %975 = vmatprep.subr.mxu0 0.0
    %976 = vmatpush2.msra.mxu0 0.0
    %977 = vmatprep.subr.mxu0 0.0
    %978 = vmatpush2.msra.mxu0 0.0
    %979 = vmatprep.subr.mxu0 0.0
    %980 = vmatpush2.msra.mxu0 0.0
    %981 = vmatprep.subr.mxu0 0.0
    %982 = vmatpush2.msra.mxu0 0.0
    %983 = vmatprep.subr.mxu0 0.0
    %984 = vmatpush2.msra.mxu0 0.0
    %985 = vmatprep.subr.mxu0 0.0
    %986 = vmatpush2.msra.mxu0 0.0
    %987 = vmatprep.subr.mxu0 0.0
    %988 = vmatpush2.msra.mxu0 0.0
    %989 = vmatprep.subr.mxu0 0.0
    %990 = vmatpush2.msra.mxu0 0.0
    %991 = vmatprep.subr.mxu0 0.0
    %992 = vmatpush2.msra.mxu0 0.0
    %993 = vmatprep.subr.mxu0 0.0
    %994 = vmatpush2.msra.mxu0 0.0
    %995 = vmatprep.subr.mxu0 0.0
    %996 = vmatpush2.msra.mxu0 0.0
    %997 = vmatprep.subr.mxu0 0.0
    %998 = vmatpush2.msra.mxu0 0.0
    %999 = vmatprep.subr.mxu0 0.0
    %1000 = vmatpush2.msra.mxu0 0.0
    %1001 = vmatprep.subr.mxu0 0.0
    %1002 = vmatpush2.msra.mxu0 0.0
    %1003 = vmatprep.subr.mxu0 0.0
    %1004 = vmatpush2.msra.mxu0 0.0
    %1005 = vmatprep.subr.mxu0 0.0
    %1006 = vmatpush2.msra.mxu0 0.0
    %1007 = vmatprep.mubr.f32.mxu0 0.0
    %1008 = vmatmul.mubr.f32.gmra.mxu0 %v941
    %v1009 = vpop.f32.mrf.mxu0
    %v1010 = vadd.f32 0.0, %v1009
    %v1011 = vpop.f32.mrf.mxu0
    %1012 = vdwg.mxu0
    %1013 = vrot.lane.b32.xlu0 %v149, 96
    %v1014 = vpop.permute.xlu0 %1013
    %1015 = vrot.lane.b32.xlu0 %v235, 96
    %v1016 = vpop.permute.xlu0 %1015
    %v1017 = vsel %vm353, %v1014, 0
    %v1019 = vsel %vm353, %v1016, 0
    %1021 = vmatprep.subr.mxu0 0.0
    %1022 = vmatpush1.xpose.msra.mxu0 0.0
    %1023 = vmatprep.subr.mxu0 0.0
    %1024 = vmatpush1.xpose.msra.mxu0 0.0
    %1025 = vmatprep.subr.mxu0 0.0
    %1026 = vmatpush1.xpose.msra.mxu0 0.0
    %1027 = vmatprep.subr.mxu0 0.0
    %1028 = vmatpush1.xpose.msra.mxu0 0.0
    %1029 = vmatprep.subr.mxu0 0.0
    %1030 = vmatpush1.xpose.msra.mxu0 0.0
    %1031 = vmatprep.subr.mxu0 0.0
    %1032 = vmatpush1.xpose.msra.mxu0 0.0
    %1033 = vmatprep.subr.mxu0 0.0
    %1034 = vmatpush1.xpose.msra.mxu0 0.0
    %1035 = vmatprep.subr.mxu0 0.0
    %1036 = vmatpush1.xpose.msra.mxu0 0.0
    %1037 = vmatprep.subr.mxu0 0.0
    %1038 = vmatpush1.xpose.msra.mxu0 0.0
    %1039 = vmatprep.subr.mxu0 0.0
    %1040 = vmatpush1.xpose.msra.mxu0 0.0
    %1041 = vmatprep.subr.mxu0 0.0
    %1042 = vmatpush1.xpose.msra.mxu0 0.0
    %1043 = vmatprep.subr.mxu0 0.0
    %1044 = vmatpush1.xpose.msra.mxu0 0.0
    %1045 = vmatprep.subr.mxu0 0.0
    %1046 = vmatpush1.xpose.msra.mxu0 0.0
    %1047 = vmatprep.subr.mxu0 0.0
    %1048 = vmatpush1.xpose.msra.mxu0 0.0
    %1049 = vmatprep.subr.mxu0 0.0
    %1050 = vmatpush1.xpose.msra.mxu0 0.0
    %1051 = vmatprep.subr.mxu0 0.0
    %1052 = vmatpush1.xpose.msra.mxu0 %v1019
    %1053 = vmatprep.subr.mxu0 0.0
    %1054 = vmatpush2.xpose.msra.mxu0 0.0
    %1055 = vmatprep.subr.mxu0 0.0
    %1056 = vmatpush2.xpose.msra.mxu0 0.0
    %1057 = vmatprep.subr.mxu0 0.0
    %1058 = vmatpush2.xpose.msra.mxu0 0.0
    %1059 = vmatprep.subr.mxu0 0.0
    %1060 = vmatpush2.xpose.msra.mxu0 0.0
    %1061 = vmatprep.subr.mxu0 0.0
    %1062 = vmatpush2.xpose.msra.mxu0 0.0
    %1063 = vmatprep.subr.mxu0 0.0
    %1064 = vmatpush2.xpose.msra.mxu0 0.0
    %1065 = vmatprep.subr.mxu0 0.0
    %1066 = vmatpush2.xpose.msra.mxu0 0.0
    %1067 = vmatprep.subr.mxu0 0.0
    %1068 = vmatpush2.xpose.msra.mxu0 0.0
    %1069 = vmatprep.subr.mxu0 0.0
    %1070 = vmatpush2.xpose.msra.mxu0 0.0
    %1071 = vmatprep.subr.mxu0 0.0
    %1072 = vmatpush2.xpose.msra.mxu0 0.0
    %1073 = vmatprep.subr.mxu0 0.0
    %1074 = vmatpush2.xpose.msra.mxu0 0.0
    %1075 = vmatprep.subr.mxu0 0.0
    %1076 = vmatpush2.xpose.msra.mxu0 0.0
    %1077 = vmatprep.subr.mxu0 0.0
    %1078 = vmatpush2.xpose.msra.mxu0 0.0
    %1079 = vmatprep.subr.mxu0 0.0
    %1080 = vmatpush2.xpose.msra.mxu0 0.0
    %1081 = vmatprep.subr.mxu0 0.0
    %1082 = vmatpush2.xpose.msra.mxu0 0.0
    %1083 = vmatprep.subr.mxu0 0.0
    %1084 = vmatpush2.xpose.msra.mxu0 0.0
    %1085 = vmatprep.mubr.f32.mxu0 0.0
    %1086 = vmatmul.mubr.f32.gmra.mxu0 %v1017
    %v1087 = vpop.f32.mrf.mxu0
    %v1088 = vadd.f32 0.0, %v1087
    %v1089 = vpop.f32.mrf.mxu0
    %1090 = vdwg.mxu0
    %1091 = vrot.lane.b32.xlu0 %v154, 96
    %v1092 = vpop.permute.xlu0 %1091
    %1093 = vrot.lane.b32.xlu0 %v240, 96
    %v1094 = vpop.permute.xlu0 %1093
    %v1095 = vsel %vm353, %v1092, 0
    %v1097 = vsel %vm353, %v1094, 0
    %1099 = vmatprep.subr.mxu0 0.0
    %1100 = vmatpush1.xpose.msra.mxu0 0.0
    %1101 = vmatprep.subr.mxu0 0.0
    %1102 = vmatpush1.xpose.msra.mxu0 0.0
    %1103 = vmatprep.subr.mxu0 0.0
    %1104 = vmatpush1.xpose.msra.mxu0 0.0
    %1105 = vmatprep.subr.mxu0 0.0
    %1106 = vmatpush1.xpose.msra.mxu0 0.0
    %1107 = vmatprep.subr.mxu0 0.0
    %1108 = vmatpush1.xpose.msra.mxu0 0.0
    %1109 = vmatprep.subr.mxu0 0.0
    %1110 = vmatpush1.xpose.msra.mxu0 0.0
    %1111 = vmatprep.subr.mxu0 0.0
    %1112 = vmatpush1.xpose.msra.mxu0 0.0
    %1113 = vmatprep.subr.mxu0 0.0
    %1114 = vmatpush1.xpose.msra.mxu0 0.0
    %1115 = vmatprep.subr.mxu0 0.0
    %1116 = vmatpush1.xpose.msra.mxu0 0.0
    %1117 = vmatprep.subr.mxu0 0.0
    %1118 = vmatpush1.xpose.msra.mxu0 0.0
    %1119 = vmatprep.subr.mxu0 0.0
    %1120 = vmatpush1.xpose.msra.mxu0 0.0
    %1121 = vmatprep.subr.mxu0 0.0
    %1122 = vmatpush1.xpose.msra.mxu0 0.0
    %1123 = vmatprep.subr.mxu0 0.0
    %1124 = vmatpush1.xpose.msra.mxu0 0.0
    %1125 = vmatprep.subr.mxu0 0.0
    %1126 = vmatpush1.xpose.msra.mxu0 0.0
    %1127 = vmatprep.subr.mxu0 0.0
    %1128 = vmatpush1.xpose.msra.mxu0 0.0
    %1129 = vmatprep.subr.mxu0 0.0
    %1130 = vmatpush1.xpose.msra.mxu0 %v1097
    %1131 = vmatprep.subr.mxu0 0.0
    %1132 = vmatpush2.xpose.msra.mxu0 0.0
    %1133 = vmatprep.subr.mxu0 0.0
    %1134 = vmatpush2.xpose.msra.mxu0 0.0
    %1135 = vmatprep.subr.mxu0 0.0
    %1136 = vmatpush2.xpose.msra.mxu0 0.0
    %1137 = vmatprep.subr.mxu0 0.0
    %1138 = vmatpush2.xpose.msra.mxu0 0.0
    %1139 = vmatprep.subr.mxu0 0.0
    %1140 = vmatpush2.xpose.msra.mxu0 0.0
    %1141 = vmatprep.subr.mxu0 0.0
    %1142 = vmatpush2.xpose.msra.mxu0 0.0
    %1143 = vmatprep.subr.mxu0 0.0
    %1144 = vmatpush2.xpose.msra.mxu0 0.0
    %1145 = vmatprep.subr.mxu0 0.0
    %1146 = vmatpush2.xpose.msra.mxu0 0.0
    %1147 = vmatprep.subr.mxu0 0.0
    %1148 = vmatpush2.xpose.msra.mxu0 0.0
    %1149 = vmatprep.subr.mxu0 0.0
    %1150 = vmatpush2.xpose.msra.mxu0 0.0
    %1151 = vmatprep.subr.mxu0 0.0
    %1152 = vmatpush2.xpose.msra.mxu0 0.0
    %1153 = vmatprep.subr.mxu0 0.0
    %1154 = vmatpush2.xpose.msra.mxu0 0.0
    %1155 = vmatprep.subr.mxu0 0.0
    %1156 = vmatpush2.xpose.msra.mxu0 0.0
    %1157 = vmatprep.subr.mxu0 0.0
    %1158 = vmatpush2.xpose.msra.mxu0 0.0
    %1159 = vmatprep.subr.mxu0 0.0
    %1160 = vmatpush2.xpose.msra.mxu0 0.0
    %1161 = vmatprep.subr.mxu0 0.0
    %1162 = vmatpush2.xpose.msra.mxu0 0.0
    %1163 = vmatprep.mubr.f32.mxu0 0.0
    %1164 = vmatmul.mubr.f32.gmra.mxu0 %v1095
    %v1165 = vpop.f32.mrf.mxu0
    %v1166 = vadd.f32 0.0, %v1165
    %v1167 = vpop.f32.mrf.mxu0
    %1168 = vdwg.mxu0
    %v1169 = vmul.f32 %v1088, 0.25
    %v1170 = vmul.f32 %v1166, 0.25
    %v1171 = vmul.f32 %v1169, 1.442695
    %v1172 = vpow.pop %v1171
    %v1173 = vmul.f32 %v1170, 1.442695
    %v1174 = vpow.pop %v1173
    %v1175 = vmul.f32 %v1172, %v515
    %v1176 = vmul.f32 %v1174, %v519
    %v1177 = vsel %vm524, %v1175, 0.0
    %1178 = vadd.xlane.f32.xlu0 %v1177
    %v1179 = vpop.xlane.xlu0 %1178
    %v1180 = vsel %vm524, %v1176, 0.0
    %1181 = vadd.xlane.f32.xlu0 %v1180
    %v1182 = vpop.xlane.xlu0 %1181
    %v1183 = vadd.f32 %v1179, 1e-08
    %v1184 = vadd.f32 %v1182, 1e-08
    %v1185 = vrcp.pop %v1183
    %v1186 = vmul.f32 %v1175, %v1185
    %v1187 = vrcp.pop %v1184
    %v1188 = vmul.f32 %v1176, %v1187
    %1189 = vrot.lane.b32.xlu0 %v321, 96
    %v1190 = vpop.permute.xlu0 %1189
    %v1193 = vsel %vm524, %v1186, 0
    %1195 = vmatprep.subr.mxu0 0.0
    %1196 = vmatpush1.msra.mxu0 0.0
    %1197 = vmatprep.subr.mxu0 0.0
    %1198 = vmatpush1.msra.mxu0 0.0
    %1199 = vmatprep.subr.mxu0 0.0
    %1200 = vmatpush1.msra.mxu0 0.0
    %1201 = vmatprep.subr.mxu0 0.0
    %1202 = vmatpush1.msra.mxu0 0.0
    %1203 = vmatprep.subr.mxu0 0.0
    %1204 = vmatpush1.msra.mxu0 0.0
    %1205 = vmatprep.subr.mxu0 0.0
    %1206 = vmatpush1.msra.mxu0 0.0
    %1207 = vmatprep.subr.mxu0 0.0
    %1208 = vmatpush1.msra.mxu0 0.0
    %1209 = vmatprep.subr.mxu0 0.0
    %1210 = vmatpush1.msra.mxu0 0.0
    %1211 = vmatprep.subr.mxu0 0.0
    %1212 = vmatpush1.msra.mxu0 0.0
    %1213 = vmatprep.subr.mxu0 0.0
    %1214 = vmatpush1.msra.mxu0 0.0
    %1215 = vmatprep.subr.mxu0 0.0
    %1216 = vmatpush1.msra.mxu0 0.0
    %1217 = vmatprep.subr.mxu0 0.0
    %1218 = vmatpush1.msra.mxu0 0.0
    %1219 = vmatprep.subr.mxu0 0.0
    %1220 = vmatpush1.msra.mxu0 0.0
    %1221 = vmatprep.subr.mxu0 0.0
    %1222 = vmatpush1.msra.mxu0 0.0
    %1223 = vmatprep.subr.mxu0 0.0
    %1224 = vmatpush1.msra.mxu0 0.0
    %1225 = vmatprep.subr.mxu0 0.0
    %1226 = vmatpush1.msra.mxu0 %v1190
    %1227 = vmatprep.subr.mxu0 0.0
    %1228 = vmatpush2.msra.mxu0 0.0
    %1229 = vmatprep.subr.mxu0 0.0
    %1230 = vmatpush2.msra.mxu0 0.0
    %1231 = vmatprep.subr.mxu0 0.0
    %1232 = vmatpush2.msra.mxu0 0.0
    %1233 = vmatprep.subr.mxu0 0.0
    %1234 = vmatpush2.msra.mxu0 0.0
    %1235 = vmatprep.subr.mxu0 0.0
    %1236 = vmatpush2.msra.mxu0 0.0
    %1237 = vmatprep.subr.mxu0 0.0
    %1238 = vmatpush2.msra.mxu0 0.0
    %1239 = vmatprep.subr.mxu0 0.0
    %1240 = vmatpush2.msra.mxu0 0.0
    %1241 = vmatprep.subr.mxu0 0.0
    %1242 = vmatpush2.msra.mxu0 0.0
    %1243 = vmatprep.subr.mxu0 0.0
    %1244 = vmatpush2.msra.mxu0 0.0
    %1245 = vmatprep.subr.mxu0 0.0
    %1246 = vmatpush2.msra.mxu0 0.0
    %1247 = vmatprep.subr.mxu0 0.0
    %1248 = vmatpush2.msra.mxu0 0.0
    %1249 = vmatprep.subr.mxu0 0.0
    %1250 = vmatpush2.msra.mxu0 0.0
    %1251 = vmatprep.subr.mxu0 0.0
    %1252 = vmatpush2.msra.mxu0 0.0
    %1253 = vmatprep.subr.mxu0 0.0
    %1254 = vmatpush2.msra.mxu0 0.0
    %1255 = vmatprep.subr.mxu0 0.0
    %1256 = vmatpush2.msra.mxu0 0.0
    %1257 = vmatprep.subr.mxu0 0.0
    %1258 = vmatpush2.msra.mxu0 0.0
    %1259 = vmatprep.mubr.f32.mxu0 0.0
    %1260 = vmatmul.mubr.f32.gmra.mxu0 %v1193
    %v1261 = vpop.f32.mrf.mxu0
    %v1262 = vadd.f32 0.0, %v1261
    %v1263 = vpop.f32.mrf.mxu0
    %1264 = vdwg.mxu0
    %1265 = vrot.lane.b32.xlu0 %v326, 96
    %v1266 = vpop.permute.xlu0 %1265
    %v1269 = vsel %vm524, %v1188, 0
    %1271 = vmatprep.subr.mxu0 0.0
    %1272 = vmatpush1.msra.mxu0 0.0
    %1273 = vmatprep.subr.mxu0 0.0
    %1274 = vmatpush1.msra.mxu0 0.0
    %1275 = vmatprep.subr.mxu0 0.0
    %1276 = vmatpush1.msra.mxu0 0.0
    %1277 = vmatprep.subr.mxu0 0.0
    %1278 = vmatpush1.msra.mxu0 0.0
    %1279 = vmatprep.subr.mxu0 0.0
    %1280 = vmatpush1.msra.mxu0 0.0
    %1281 = vmatprep.subr.mxu0 0.0
    %1282 = vmatpush1.msra.mxu0 0.0
    %1283 = vmatprep.subr.mxu0 0.0
    %1284 = vmatpush1.msra.mxu0 0.0
    %1285 = vmatprep.subr.mxu0 0.0
    %1286 = vmatpush1.msra.mxu0 0.0
    %1287 = vmatprep.subr.mxu0 0.0
    %1288 = vmatpush1.msra.mxu0 0.0
    %1289 = vmatprep.subr.mxu0 0.0
    %1290 = vmatpush1.msra.mxu0 0.0
    %1291 = vmatprep.subr.mxu0 0.0
    %1292 = vmatpush1.msra.mxu0 0.0
    %1293 = vmatprep.subr.mxu0 0.0
    %1294 = vmatpush1.msra.mxu0 0.0
    %1295 = vmatprep.subr.mxu0 0.0
    %1296 = vmatpush1.msra.mxu0 0.0
    %1297 = vmatprep.subr.mxu0 0.0
    %1298 = vmatpush1.msra.mxu0 0.0
    %1299 = vmatprep.subr.mxu0 0.0
    %1300 = vmatpush1.msra.mxu0 0.0
    %1301 = vmatprep.subr.mxu0 0.0
    %1302 = vmatpush1.msra.mxu0 %v1266
    %1303 = vmatprep.subr.mxu0 0.0
    %1304 = vmatpush2.msra.mxu0 0.0
    %1305 = vmatprep.subr.mxu0 0.0
    %1306 = vmatpush2.msra.mxu0 0.0
    %1307 = vmatprep.subr.mxu0 0.0
    %1308 = vmatpush2.msra.mxu0 0.0
    %1309 = vmatprep.subr.mxu0 0.0
    %1310 = vmatpush2.msra.mxu0 0.0
    %1311 = vmatprep.subr.mxu0 0.0
    %1312 = vmatpush2.msra.mxu0 0.0
    %1313 = vmatprep.subr.mxu0 0.0
    %1314 = vmatpush2.msra.mxu0 0.0
    %1315 = vmatprep.subr.mxu0 0.0
    %1316 = vmatpush2.msra.mxu0 0.0
    %1317 = vmatprep.subr.mxu0 0.0
    %1318 = vmatpush2.msra.mxu0 0.0
    %1319 = vmatprep.subr.mxu0 0.0
    %1320 = vmatpush2.msra.mxu0 0.0
    %1321 = vmatprep.subr.mxu0 0.0
    %1322 = vmatpush2.msra.mxu0 0.0
    %1323 = vmatprep.subr.mxu0 0.0
    %1324 = vmatpush2.msra.mxu0 0.0
    %1325 = vmatprep.subr.mxu0 0.0
    %1326 = vmatpush2.msra.mxu0 0.0
    %1327 = vmatprep.subr.mxu0 0.0
    %1328 = vmatpush2.msra.mxu0 0.0
    %1329 = vmatprep.subr.mxu0 0.0
    %1330 = vmatpush2.msra.mxu0 0.0
    %1331 = vmatprep.subr.mxu0 0.0
    %1332 = vmatpush2.msra.mxu0 0.0
    %1333 = vmatprep.subr.mxu0 0.0
    %1334 = vmatpush2.msra.mxu0 0.0
    %1335 = vmatprep.mubr.f32.mxu0 0.0
    %1336 = vmatmul.mubr.f32.gmra.mxu0 %v1269
    %v1337 = vpop.f32.mrf.mxu0
    %v1338 = vadd.f32 0.0, %v1337
    %v1339 = vpop.f32.mrf.mxu0
    %1340 = vdwg.mxu0
    %1341 = vrot.lane.b32.xlu0 %v149, 80
    %v1342 = vpop.permute.xlu0 %1341
    %1343 = vrot.lane.b32.xlu0 %v235, 80
    %v1344 = vpop.permute.xlu0 %1343
    %v1345 = vsel %vm353, %v1342, 0
    %v1347 = vsel %vm353, %v1344, 0
    %1349 = vmatprep.subr.mxu0 0.0
    %1350 = vmatpush1.xpose.msra.mxu0 0.0
    %1351 = vmatprep.subr.mxu0 0.0
    %1352 = vmatpush1.xpose.msra.mxu0 0.0
    %1353 = vmatprep.subr.mxu0 0.0
    %1354 = vmatpush1.xpose.msra.mxu0 0.0
    %1355 = vmatprep.subr.mxu0 0.0
    %1356 = vmatpush1.xpose.msra.mxu0 0.0
    %1357 = vmatprep.subr.mxu0 0.0
    %1358 = vmatpush1.xpose.msra.mxu0 0.0
    %1359 = vmatprep.subr.mxu0 0.0
    %1360 = vmatpush1.xpose.msra.mxu0 0.0
    %1361 = vmatprep.subr.mxu0 0.0
    %1362 = vmatpush1.xpose.msra.mxu0 0.0
    %1363 = vmatprep.subr.mxu0 0.0
    %1364 = vmatpush1.xpose.msra.mxu0 0.0
    %1365 = vmatprep.subr.mxu0 0.0
    %1366 = vmatpush1.xpose.msra.mxu0 0.0
    %1367 = vmatprep.subr.mxu0 0.0
    %1368 = vmatpush1.xpose.msra.mxu0 0.0
    %1369 = vmatprep.subr.mxu0 0.0
    %1370 = vmatpush1.xpose.msra.mxu0 0.0
    %1371 = vmatprep.subr.mxu0 0.0
    %1372 = vmatpush1.xpose.msra.mxu0 0.0
    %1373 = vmatprep.subr.mxu0 0.0
    %1374 = vmatpush1.xpose.msra.mxu0 0.0
    %1375 = vmatprep.subr.mxu0 0.0
    %1376 = vmatpush1.xpose.msra.mxu0 0.0
    %1377 = vmatprep.subr.mxu0 0.0
    %1378 = vmatpush1.xpose.msra.mxu0 0.0
    %1379 = vmatprep.subr.mxu0 0.0
    %1380 = vmatpush1.xpose.msra.mxu0 %v1347
    %1381 = vmatprep.subr.mxu0 0.0
    %1382 = vmatpush2.xpose.msra.mxu0 0.0
    %1383 = vmatprep.subr.mxu0 0.0
    %1384 = vmatpush2.xpose.msra.mxu0 0.0
    %1385 = vmatprep.subr.mxu0 0.0
    %1386 = vmatpush2.xpose.msra.mxu0 0.0
    %1387 = vmatprep.subr.mxu0 0.0
    %1388 = vmatpush2.xpose.msra.mxu0 0.0
    %1389 = vmatprep.subr.mxu0 0.0
    %1390 = vmatpush2.xpose.msra.mxu0 0.0
    %1391 = vmatprep.subr.mxu0 0.0
    %1392 = vmatpush2.xpose.msra.mxu0 0.0
    %1393 = vmatprep.subr.mxu0 0.0
    %1394 = vmatpush2.xpose.msra.mxu0 0.0
    %1395 = vmatprep.subr.mxu0 0.0
    %1396 = vmatpush2.xpose.msra.mxu0 0.0
    %1397 = vmatprep.subr.mxu0 0.0
    %1398 = vmatpush2.xpose.msra.mxu0 0.0
    %1399 = vmatprep.subr.mxu0 0.0
    %1400 = vmatpush2.xpose.msra.mxu0 0.0
    %1401 = vmatprep.subr.mxu0 0.0
    %1402 = vmatpush2.xpose.msra.mxu0 0.0
    %1403 = vmatprep.subr.mxu0 0.0
    %1404 = vmatpush2.xpose.msra.mxu0 0.0
    %1405 = vmatprep.subr.mxu0 0.0
    %1406 = vmatpush2.xpose.msra.mxu0 0.0
    %1407 = vmatprep.subr.mxu0 0.0
    %1408 = vmatpush2.xpose.msra.mxu0 0.0
    %1409 = vmatprep.subr.mxu0 0.0
    %1410 = vmatpush2.xpose.msra.mxu0 0.0
    %1411 = vmatprep.subr.mxu0 0.0
    %1412 = vmatpush2.xpose.msra.mxu0 0.0
    %1413 = vmatprep.mubr.f32.mxu0 0.0
    %1414 = vmatmul.mubr.f32.gmra.mxu0 %v1345
    %v1415 = vpop.f32.mrf.mxu0
    %v1416 = vadd.f32 0.0, %v1415
    %v1417 = vpop.f32.mrf.mxu0
    %1418 = vdwg.mxu0
    %1419 = vrot.lane.b32.xlu0 %v154, 80
    %v1420 = vpop.permute.xlu0 %1419
    %1421 = vrot.lane.b32.xlu0 %v240, 80
    %v1422 = vpop.permute.xlu0 %1421
    %v1423 = vsel %vm353, %v1420, 0
    %v1425 = vsel %vm353, %v1422, 0
    %1427 = vmatprep.subr.mxu0 0.0
    %1428 = vmatpush1.xpose.msra.mxu0 0.0
    %1429 = vmatprep.subr.mxu0 0.0
    %1430 = vmatpush1.xpose.msra.mxu0 0.0
    %1431 = vmatprep.subr.mxu0 0.0
    %1432 = vmatpush1.xpose.msra.mxu0 0.0
    %1433 = vmatprep.subr.mxu0 0.0
    %1434 = vmatpush1.xpose.msra.mxu0 0.0
    %1435 = vmatprep.subr.mxu0 0.0
    %1436 = vmatpush1.xpose.msra.mxu0 0.0
    %1437 = vmatprep.subr.mxu0 0.0
    %1438 = vmatpush1.xpose.msra.mxu0 0.0
    %1439 = vmatprep.subr.mxu0 0.0
    %1440 = vmatpush1.xpose.msra.mxu0 0.0
    %1441 = vmatprep.subr.mxu0 0.0
    %1442 = vmatpush1.xpose.msra.mxu0 0.0
    %1443 = vmatprep.subr.mxu0 0.0
    %1444 = vmatpush1.xpose.msra.mxu0 0.0
    %1445 = vmatprep.subr.mxu0 0.0
    %1446 = vmatpush1.xpose.msra.mxu0 0.0
    %1447 = vmatprep.subr.mxu0 0.0
    %1448 = vmatpush1.xpose.msra.mxu0 0.0
    %1449 = vmatprep.subr.mxu0 0.0
    %1450 = vmatpush1.xpose.msra.mxu0 0.0
    %1451 = vmatprep.subr.mxu0 0.0
    %1452 = vmatpush1.xpose.msra.mxu0 0.0
    %1453 = vmatprep.subr.mxu0 0.0
    %1454 = vmatpush1.xpose.msra.mxu0 0.0
    %1455 = vmatprep.subr.mxu0 0.0
    %1456 = vmatpush1.xpose.msra.mxu0 0.0
    %1457 = vmatprep.subr.mxu0 0.0
    %1458 = vmatpush1.xpose.msra.mxu0 %v1425
    %1459 = vmatprep.subr.mxu0 0.0
    %1460 = vmatpush2.xpose.msra.mxu0 0.0
    %1461 = vmatprep.subr.mxu0 0.0
    %1462 = vmatpush2.xpose.msra.mxu0 0.0
    %1463 = vmatprep.subr.mxu0 0.0
    %1464 = vmatpush2.xpose.msra.mxu0 0.0
    %1465 = vmatprep.subr.mxu0 0.0
    %1466 = vmatpush2.xpose.msra.mxu0 0.0
    %1467 = vmatprep.subr.mxu0 0.0
    %1468 = vmatpush2.xpose.msra.mxu0 0.0
    %1469 = vmatprep.subr.mxu0 0.0
    %1470 = vmatpush2.xpose.msra.mxu0 0.0
    %1471 = vmatprep.subr.mxu0 0.0
    %1472 = vmatpush2.xpose.msra.mxu0 0.0
    %1473 = vmatprep.subr.mxu0 0.0
    %1474 = vmatpush2.xpose.msra.mxu0 0.0
    %1475 = vmatprep.subr.mxu0 0.0
    %1476 = vmatpush2.xpose.msra.mxu0 0.0
    %1477 = vmatprep.subr.mxu0 0.0
    %1478 = vmatpush2.xpose.msra.mxu0 0.0
    %1479 = vmatprep.subr.mxu0 0.0
    %1480 = vmatpush2.xpose.msra.mxu0 0.0
    %1481 = vmatprep.subr.mxu0 0.0
    %1482 = vmatpush2.xpose.msra.mxu0 0.0
    %1483 = vmatprep.subr.mxu0 0.0
    %1484 = vmatpush2.xpose.msra.mxu0 0.0
    %1485 = vmatprep.subr.mxu0 0.0
    %1486 = vmatpush2.xpose.msra.mxu0 0.0
    %1487 = vmatprep.subr.mxu0 0.0
    %1488 = vmatpush2.xpose.msra.mxu0 0.0
    %1489 = vmatprep.subr.mxu0 0.0
    %1490 = vmatpush2.xpose.msra.mxu0 0.0
    %1491 = vmatprep.mubr.f32.mxu0 0.0
    %1492 = vmatmul.mubr.f32.gmra.mxu0 %v1423
    %v1493 = vpop.f32.mrf.mxu0
    %v1494 = vadd.f32 0.0, %v1493
    %v1495 = vpop.f32.mrf.mxu0
    %1496 = vdwg.mxu0
    %v1497 = vmul.f32 %v1416, 0.25
    %v1498 = vmul.f32 %v1494, 0.25
    %v1499 = vmul.f32 %v1497, 1.442695
    %v1500 = vpow.pop %v1499
    %v1501 = vmul.f32 %v1498, 1.442695
    %v1502 = vpow.pop %v1501
    %v1503 = vmul.f32 %v1500, %v515
    %v1504 = vmul.f32 %v1502, %v519
    %v1505 = vsel %vm524, %v1503, 0.0
    %1506 = vadd.xlane.f32.xlu0 %v1505
    %v1507 = vpop.xlane.xlu0 %1506
    %v1508 = vsel %vm524, %v1504, 0.0
    %1509 = vadd.xlane.f32.xlu0 %v1508
    %v1510 = vpop.xlane.xlu0 %1509
    %v1511 = vadd.f32 %v1507, 1e-08
    %v1512 = vadd.f32 %v1510, 1e-08
    %v1513 = vrcp.pop %v1511
    %v1514 = vmul.f32 %v1503, %v1513
    %v1515 = vrcp.pop %v1512
    %v1516 = vmul.f32 %v1504, %v1515
    %1517 = vrot.lane.b32.xlu0 %v321, 80
    %v1518 = vpop.permute.xlu0 %1517
    %v1521 = vsel %vm524, %v1514, 0
    %1523 = vmatprep.subr.mxu0 0.0
    %1524 = vmatpush1.msra.mxu0 0.0
    %1525 = vmatprep.subr.mxu0 0.0
    %1526 = vmatpush1.msra.mxu0 0.0
    %1527 = vmatprep.subr.mxu0 0.0
    %1528 = vmatpush1.msra.mxu0 0.0
    %1529 = vmatprep.subr.mxu0 0.0
    %1530 = vmatpush1.msra.mxu0 0.0
    %1531 = vmatprep.subr.mxu0 0.0
    %1532 = vmatpush1.msra.mxu0 0.0
    %1533 = vmatprep.subr.mxu0 0.0
    %1534 = vmatpush1.msra.mxu0 0.0
    %1535 = vmatprep.subr.mxu0 0.0
    %1536 = vmatpush1.msra.mxu0 0.0
    %1537 = vmatprep.subr.mxu0 0.0
    %1538 = vmatpush1.msra.mxu0 0.0
    %1539 = vmatprep.subr.mxu0 0.0
    %1540 = vmatpush1.msra.mxu0 0.0
    %1541 = vmatprep.subr.mxu0 0.0
    %1542 = vmatpush1.msra.mxu0 0.0
    %1543 = vmatprep.subr.mxu0 0.0
    %1544 = vmatpush1.msra.mxu0 0.0
    %1545 = vmatprep.subr.mxu0 0.0
    %1546 = vmatpush1.msra.mxu0 0.0
    %1547 = vmatprep.subr.mxu0 0.0
    %1548 = vmatpush1.msra.mxu0 0.0
    %1549 = vmatprep.subr.mxu0 0.0
    %1550 = vmatpush1.msra.mxu0 0.0
    %1551 = vmatprep.subr.mxu0 0.0
    %1552 = vmatpush1.msra.mxu0 0.0
    %1553 = vmatprep.subr.mxu0 0.0
    %1554 = vmatpush1.msra.mxu0 %v1518
    %1555 = vmatprep.subr.mxu0 0.0
    %1556 = vmatpush2.msra.mxu0 0.0
    %1557 = vmatprep.subr.mxu0 0.0
    %1558 = vmatpush2.msra.mxu0 0.0
    %1559 = vmatprep.subr.mxu0 0.0
    %1560 = vmatpush2.msra.mxu0 0.0
    %1561 = vmatprep.subr.mxu0 0.0
    %1562 = vmatpush2.msra.mxu0 0.0
    %1563 = vmatprep.subr.mxu0 0.0
    %1564 = vmatpush2.msra.mxu0 0.0
    %1565 = vmatprep.subr.mxu0 0.0
    %1566 = vmatpush2.msra.mxu0 0.0
    %1567 = vmatprep.subr.mxu0 0.0
    %1568 = vmatpush2.msra.mxu0 0.0
    %1569 = vmatprep.subr.mxu0 0.0
    %1570 = vmatpush2.msra.mxu0 0.0
    %1571 = vmatprep.subr.mxu0 0.0
    %1572 = vmatpush2.msra.mxu0 0.0
    %1573 = vmatprep.subr.mxu0 0.0
    %1574 = vmatpush2.msra.mxu0 0.0
    %1575 = vmatprep.subr.mxu0 0.0
    %1576 = vmatpush2.msra.mxu0 0.0
    %1577 = vmatprep.subr.mxu0 0.0
    %1578 = vmatpush2.msra.mxu0 0.0
    %1579 = vmatprep.subr.mxu0 0.0
    %1580 = vmatpush2.msra.mxu0 0.0
    %1581 = vmatprep.subr.mxu0 0.0
    %1582 = vmatpush2.msra.mxu0 0.0
    %1583 = vmatprep.subr.mxu0 0.0
    %1584 = vmatpush2.msra.mxu0 0.0
    %1585 = vmatprep.subr.mxu0 0.0
    %1586 = vmatpush2.msra.mxu0 0.0
    %1587 = vmatprep.mubr.f32.mxu0 0.0
    %1588 = vmatmul.mubr.f32.gmra.mxu0 %v1521
    %v1589 = vpop.f32.mrf.mxu0
    %v1590 = vadd.f32 0.0, %v1589
    %v1591 = vpop.f32.mrf.mxu0
    %1592 = vdwg.mxu0
    %1593 = vrot.lane.b32.xlu0 %v326, 80
    %v1594 = vpop.permute.xlu0 %1593
    %v1597 = vsel %vm524, %v1516, 0
    %1599 = vmatprep.subr.mxu0 0.0
    %1600 = vmatpush1.msra.mxu0 0.0
    %1601 = vmatprep.subr.mxu0 0.0
    %1602 = vmatpush1.msra.mxu0 0.0
    %1603 = vmatprep.subr.mxu0 0.0
    %1604 = vmatpush1.msra.mxu0 0.0
    %1605 = vmatprep.subr.mxu0 0.0
    %1606 = vmatpush1.msra.mxu0 0.0
    %1607 = vmatprep.subr.mxu0 0.0
    %1608 = vmatpush1.msra.mxu0 0.0
    %1609 = vmatprep.subr.mxu0 0.0
    %1610 = vmatpush1.msra.mxu0 0.0
    %1611 = vmatprep.subr.mxu0 0.0
    %1612 = vmatpush1.msra.mxu0 0.0
    %1613 = vmatprep.subr.mxu0 0.0
    %1614 = vmatpush1.msra.mxu0 0.0
    %1615 = vmatprep.subr.mxu0 0.0
    %1616 = vmatpush1.msra.mxu0 0.0
    %1617 = vmatprep.subr.mxu0 0.0
    %1618 = vmatpush1.msra.mxu0 0.0
    %1619 = vmatprep.subr.mxu0 0.0
    %1620 = vmatpush1.msra.mxu0 0.0
    %1621 = vmatprep.subr.mxu0 0.0
    %1622 = vmatpush1.msra.mxu0 0.0
    %1623 = vmatprep.subr.mxu0 0.0
    %1624 = vmatpush1.msra.mxu0 0.0
    %1625 = vmatprep.subr.mxu0 0.0
    %1626 = vmatpush1.msra.mxu0 0.0
    %1627 = vmatprep.subr.mxu0 0.0
    %1628 = vmatpush1.msra.mxu0 0.0
    %1629 = vmatprep.subr.mxu0 0.0
    %1630 = vmatpush1.msra.mxu0 %v1594
    %1631 = vmatprep.subr.mxu0 0.0
    %1632 = vmatpush2.msra.mxu0 0.0
    %1633 = vmatprep.subr.mxu0 0.0
    %1634 = vmatpush2.msra.mxu0 0.0
    %1635 = vmatprep.subr.mxu0 0.0
    %1636 = vmatpush2.msra.mxu0 0.0
    %1637 = vmatprep.subr.mxu0 0.0
    %1638 = vmatpush2.msra.mxu0 0.0
    %1639 = vmatprep.subr.mxu0 0.0
    %1640 = vmatpush2.msra.mxu0 0.0
    %1641 = vmatprep.subr.mxu0 0.0
    %1642 = vmatpush2.msra.mxu0 0.0
    %1643 = vmatprep.subr.mxu0 0.0
    %1644 = vmatpush2.msra.mxu0 0.0
    %1645 = vmatprep.subr.mxu0 0.0
    %1646 = vmatpush2.msra.mxu0 0.0
    %1647 = vmatprep.subr.mxu0 0.0
    %1648 = vmatpush2.msra.mxu0 0.0
    %1649 = vmatprep.subr.mxu0 0.0
    %1650 = vmatpush2.msra.mxu0 0.0
    %1651 = vmatprep.subr.mxu0 0.0
    %1652 = vmatpush2.msra.mxu0 0.0
    %1653 = vmatprep.subr.mxu0 0.0
    %1654 = vmatpush2.msra.mxu0 0.0
    %1655 = vmatprep.subr.mxu0 0.0
    %1656 = vmatpush2.msra.mxu0 0.0
    %1657 = vmatprep.subr.mxu0 0.0
    %1658 = vmatpush2.msra.mxu0 0.0
    %1659 = vmatprep.subr.mxu0 0.0
    %1660 = vmatpush2.msra.mxu0 0.0
    %1661 = vmatprep.subr.mxu0 0.0
    %1662 = vmatpush2.msra.mxu0 0.0
    %1663 = vmatprep.mubr.f32.mxu0 0.0
    %1664 = vmatmul.mubr.f32.gmra.mxu0 %v1597
    %v1665 = vpop.f32.mrf.mxu0
    %v1666 = vadd.f32 0.0, %v1665
    %v1667 = vpop.f32.mrf.mxu0
    %1668 = vdwg.mxu0
    %1671 = vrot.lane.b32.xlu0 %v933, 16
    %v1672 = vpop.permute.xlu0 %1671
    %1673 = vrot.lane.b32.xlu0 %v1010, 16
    %v1674 = vpop.permute.xlu0 %1673
    %1679 = vrot.lane.b32.xlu0 %v1262, 32
    %v1680 = vpop.permute.xlu0 %1679
    %1681 = vrot.lane.b32.xlu0 %v1338, 32
    %v1682 = vpop.permute.xlu0 %1681
    %1687 = vrot.lane.b32.xlu0 %v1590, 48
    %v1688 = vpop.permute.xlu0 %1687
    %1689 = vrot.lane.b32.xlu0 %v1666, 48
    %v1690 = vpop.permute.xlu0 %1689
    %v1693 = vsel %vm353, %v607, %v1672
    %v1694 = vsel %vm353, %v680, %v1674
    %v1695 = vsel %vm75, %v1693, %v1680
    %v1696 = vsel %vm75, %v1694, %v1682
    %vm1697 = vcmask 392192
    %v1698 = vsel %vm1697, %v1695, %v1688
    %v1699 = vsel %vm1697, %v1696, %v1690
    %v1700 = vld [vmem:[%s8] sm:$0xff]
    %v1701 = vld [vmem:[%s8 + $0x8] sm:$0xff]
    %v1702 = vld [vmem:[%s8 + $0x10] sm:$0xff]
    %v1703 = vld [vmem:[%s8 + $0x18] sm:$0xff]
    %v1704 = vld [vmem:[%s8 + $0x20] sm:$0xff]
    %v1705 = vld [vmem:[%s8 + $0x28] sm:$0xff]
    %v1706 = vld [vmem:[%s8 + $0x30] sm:$0xff]
    %v1707 = vld [vmem:[%s8 + $0x38] sm:$0xff]
    %v1708 = vld [vmem:[%s9] sm:$0x1]
    %v1710 = vlaneseq
    %v1711 = vshrl.u32 %v1710, 7
    %v1712 = vsub.s32 0, %v1711
    %v1713 = vrot.slane %v1708, %v1712
    %vm1715 = vcmask 523264
    %v1717 = vsel %vm1715, %v1698, 0
    %v1720 = vsel %vm1715, %v1699, 0
    %1722 = vmatprep.subr.mxu0 0.0
    %1723 = vmatpush1.msra.mxu0 0.0
    %1724 = vmatprep.subr.mxu0 0.0
    %1725 = vmatpush1.msra.mxu0 0.0
    %1726 = vmatprep.subr.mxu0 0.0
    %1727 = vmatpush1.msra.mxu0 0.0
    %1728 = vmatprep.subr.mxu0 0.0
    %1729 = vmatpush1.msra.mxu0 0.0
    %1730 = vmatprep.subr.mxu0 0.0
    %1731 = vmatpush1.msra.mxu0 0.0
    %1732 = vmatprep.subr.mxu0 0.0
    %1733 = vmatpush1.msra.mxu0 0.0
    %1734 = vmatprep.subr.mxu0 0.0
    %1735 = vmatpush1.msra.mxu0 0.0
    %1736 = vmatprep.subr.mxu0 0.0
    %1737 = vmatpush1.msra.mxu0 0.0
    %1738 = vmatprep.subr.mxu0 0.0
    %1739 = vmatpush1.msra.mxu0 %v1707
    %1740 = vmatprep.subr.mxu0 0.0
    %1741 = vmatpush1.msra.mxu0 %v1706
    %1742 = vmatprep.subr.mxu0 0.0
    %1743 = vmatpush1.msra.mxu0 %v1705
    %1744 = vmatprep.subr.mxu0 0.0
    %1745 = vmatpush1.msra.mxu0 %v1704
    %1746 = vmatprep.subr.mxu0 0.0
    %1747 = vmatpush1.msra.mxu0 %v1703
    %1748 = vmatprep.subr.mxu0 0.0
    %1749 = vmatpush1.msra.mxu0 %v1702
    %1750 = vmatprep.subr.mxu0 0.0
    %1751 = vmatpush1.msra.mxu0 %v1701
    %1752 = vmatprep.subr.mxu0 0.0
    %1753 = vmatpush1.msra.mxu0 %v1700
    %1754 = vmatprep.subr.mxu0 0.0
    %1755 = vmatpush2.msra.mxu0 0.0
    %1756 = vmatprep.subr.mxu0 0.0
    %1757 = vmatpush2.msra.mxu0 0.0
    %1758 = vmatprep.subr.mxu0 0.0
    %1759 = vmatpush2.msra.mxu0 0.0
    %1760 = vmatprep.subr.mxu0 0.0
    %1761 = vmatpush2.msra.mxu0 0.0
    %1762 = vmatprep.subr.mxu0 0.0
    %1763 = vmatpush2.msra.mxu0 0.0
    %1764 = vmatprep.subr.mxu0 0.0
    %1765 = vmatpush2.msra.mxu0 0.0
    %1766 = vmatprep.subr.mxu0 0.0
    %1767 = vmatpush2.msra.mxu0 0.0
    %1768 = vmatprep.subr.mxu0 0.0
    %1769 = vmatpush2.msra.mxu0 0.0
    %1770 = vmatprep.subr.mxu0 0.0
    %1771 = vmatpush2.msra.mxu0 0.0
    %1772 = vmatprep.subr.mxu0 0.0
    %1773 = vmatpush2.msra.mxu0 0.0
    %1774 = vmatprep.subr.mxu0 0.0
    %1775 = vmatpush2.msra.mxu0 0.0
    %1776 = vmatprep.subr.mxu0 0.0
    %1777 = vmatpush2.msra.mxu0 0.0
    %1778 = vmatprep.subr.mxu0 0.0
    %1779 = vmatpush2.msra.mxu0 0.0
    %1780 = vmatprep.subr.mxu0 0.0
    %1781 = vmatpush2.msra.mxu0 0.0
    %1782 = vmatprep.subr.mxu0 0.0
    %1783 = vmatpush2.msra.mxu0 0.0
    %1784 = vmatprep.subr.mxu0 0.0
    %1785 = vmatpush2.msra.mxu0 0.0
    %1786 = vmatprep.mubr.f32.mxu0 0.0
    %1787 = vmatmul.mubr.f32.gmra.mxu0 %v1717
    %v1788 = vpop.f32.mrf.mxu0
    %v1789 = vadd.f32 %v1713, %v1788
    %v1790 = vpop.f32.mrf.mxu0
    %1791 = vmatprep.mubr.f32.mxu0 0.0
    %1792 = vmatmul.mubr.f32.gmra.mxu0 %v1720
    %v1793 = vpop.f32.mrf.mxu0
    %v1794 = vadd.f32 %v1713, %v1793
    %v1795 = vpop.f32.mrf.mxu0
    %1796 = vdwg.mxu0
    %1797 = vst.msk [vmem:[#allocation7] sm:$0xff] %vm75, %v1789
    %1798 = vst.msk [vmem:[#allocation7 + $0x8] sm:$0xff] %vm75, %v1794
    // Predicated region
    $region50: #{mhsa_forward.1} parent=1 // pred_check
      _
    $region51: #{mhsa_forward.1} parent=1 // pred_check_branch
      %1800 = sbr.rel (0) target = $region53
    $region52: #{mhsa_forward.1} parent=1 // pred_region
      %s1802 = ssub.s32 256, 256
      %1803 = vsyncadd [#allocation4], %s1802
      %s1804 = sshll.u32 [#allocation7], 4
      %s1805 = int_to_ptr.vmem [resolvable:$true] %s1804
      %1810 = dma.vmem_to_hbm [thread:$0]  %s1805, 256, %s10, [#allocation4], 128, 128, 8
    $region53: #{mhsa_forward.1} parent=1 // pred_fallthru
      _
    // Predicated region
    $region54: #{mhsa_forward.1} parent=1 // pred_check
      _
    $region55: #{mhsa_forward.1} parent=1 // pred_check_branch
      %1812 = sbr.rel (0) target = $region57
    $region56: #{mhsa_forward.1} parent=1 // pred_region
      %1813 = dma.done [#allocation4], 256
    $region57: #{mhsa_forward.1} parent=1 // pred_fallthru
      _
    %1814 = vsyncpa [#allocation3], 1
    %1815 = vsyncpa [#allocation6], 1
    %1816 = vsyncpa [#allocation4], 1

</llo_original>
